<compile_context>
chip_gen: v7x
topology: tpu7x:2x2x1
jax: 0.10.0
libtpu: 0.0.40
codegen_flags: <defaults>
</compile_context>

<pallas_src>
import functools

import jax
import jax.numpy as jnp
from jax import lax
from jax.experimental import pallas as pl
from jax.experimental.pallas import tpu as pltpu

NDF = 8            # config.ndf (small, deterministic in-script)
K = 4              # conv kernel size
EPS = 1e-5         # BatchNorm2d eps
ALPHA = 0.2        # LeakyReLU negative slope
TILE_M_MAX = 1024  # max rows handled as a single tile (well inside v5e's 16 MiB scoped VMEM)
TILE_M_MULTI = 512 # tile rows for the multi-tile paths (M > TILE_M_MAX)
SPLIT_MIN_M = 512  # min rows before splitting a parallel (non-BN) layer into 2 tiles (v7x)

# (stride, use_bn, use_leakyrelu) per layer, matching the nn.Sequential
LAYER_CFG = [
    (2, False, True),   # Conv(4,   ndf)        + LeakyReLU
    (2, True,  True),   # Conv(ndf, 2ndf) + BN  + LeakyReLU
    (2, True,  True),   # Conv(2ndf,4ndf) + BN  + LeakyReLU
    (2, True,  True),   # Conv(4ndf,8ndf) + BN  + LeakyReLU
    (1, False, False),  # Conv(8ndf, 1, k4, s1, p1)
]


def round_up(x, m):
    return (x + m - 1) // m * m


# ------------------------------- Pallas kernels -------------------------------
def conv_kernel_onepass(p_ref, w_ref, s_ref, o_ref, *, use_bn, use_act, tile_m, m_total):
    """One grid step per M tile: (tile_m, Kd_pad) @ (Kd_pad, C_pad) on the MXU,
    then bias (non-BN) or single-pass full-batch BatchNorm (BN layers, which only
    take this path when the whole M dimension is one tile), then LeakyReLU."""
    z = jnp.dot(p_ref[...], w_ref[...], preferred_element_type=jnp.float32)
    s = s_ref[...]                                    # (3, C_pad) f32: bias/gamma/beta

    if not use_bn:
        z = z + s[0:1, :]                             # conv bias (BN cancels it, so BN layers skip)
        if use_act:
            z = jnp.where(z > 0, z, ALPHA * z)        # LeakyReLU(0.2) in f32 (v5e-safe)
        o_ref[...] = z.astype(o_ref.dtype)
        return

    # ---- single-pass training-mode BatchNorm: whole batch lives in this tile ----
    if tile_m != m_total:
        rows = lax.broadcasted_iota(jnp.int32, (tile_m, 1), 0)
        valid = rows < m_total                        # exclude M-padding rows from stats
        zs = jnp.where(valid, z, 0.0)
    else:
        valid = None
        zs = z
    inv_m = 1.0 / m_total
    mean = jnp.sum(zs, axis=0, keepdims=True) * inv_m
    centered = z - mean
    cs = jnp.where(valid, centered, 0.0) if valid is not None else centered
    var = jnp.sum(cs * cs, axis=0, keepdims=True) * inv_m   # biased variance, centered (stable)
    scale = s[1:2, :] * lax.rsqrt(var + EPS)                 # gamma * rsqrt(var + eps)
    zn = centered * scale + s[2:3, :]                        # + beta
    if use_act:
        zn = jnp.where(zn > 0, zn, ALPHA * zn)
    o_ref[...] = zn.astype(o_ref.dtype)


def conv_kernel_twopass(p_ref, w_ref, s_ref, o_ref, sum_ref, sq_ref, *,
                        use_act, tile_m, m_total, needs_mask):
    """grid = (2, n_m).  Pass 0 accumulates per-channel sum/sumsq over all M tiles,
    pass 1 applies BN + LeakyReLU and stores.  Only used for BN layers with
    M > TILE_M_MAX (never at the shapes in this script).  Pass-0 output writebacks
    are suppressed via the pinned out index_map (p*m, 0)."""
    p_idx = pl.program_id(0)
    m_idx = pl.program_id(1)

    # TODO(synk): pass 1 redoes the matmul; storing z in pass 0 and re-reading it via
    # input_output_aliases would halve MXU work but needs RAW-hazard-safe plumbing.
    z = jnp.dot(p_ref[...], w_ref[...], preferred_element_type=jnp.float32)
    s = s_ref[...]                                    # (3, C_pad); bias unused (BN cancels it)

    @pl.when((p_idx == 0) & (m_idx == 0))
    def _init_stats():
        sum_ref[...] = jnp.zeros_like(sum_ref)
        sq_ref[...] = jnp.zeros_like(sq_ref)

    @pl.when(p_idx == 0)
    def _accumulate_stats():                          # pass 0: per-channel sum / sumsq
        if needs_mask:
            rows = m_idx * tile_m + lax.broadcasted_iota(jnp.int32, (tile_m, 1), 0)
            zm = jnp.where(rows < m_total, z, 0.0)
        else:
            zm = z
        sum_ref[...] += jnp.sum(zm, axis=0, keepdims=True)
        # TODO(synk): E[x^2]-E[x]^2 can cancel for very large M with |mean| >> std;
        # a centered extra pass would be exact at the cost of one more matmul pass.
        sq_ref[...] += jnp.sum(zm * zm, axis=0, keepdims=True)

    @pl.when(p_idx == 1)
    def _normalize_store():                           # pass 1: BN folded into one FMA
        inv_m = 1.0 / m_total
        mean = sum_ref[...] * inv_m
        var = sq_ref[...] * inv_m - mean * mean
        scale = s[1:2, :] * lax.rsqrt(var + EPS)
        shift = s[2:3, :] - mean * scale
        zn = z * scale + shift
        if use_act:
            zn = jnp.where(zn > 0, zn, ALPHA * zn)
        o_ref[...] = zn.astype(o_ref.dtype)


# ------------------------------ layer dispatcher ------------------------------
def conv_layer(patches, w_mat, bias, gamma, beta, *, use_bn, use_act, out_dtype):
    """patches: (M, Kd) im2col matrix; w_mat: (Kd, Cout).  Pads to lane-dense shapes,
    picks the M tiling, and runs the appropriate fused kernel.  Returns (M, Cout)."""
    M, Kd = patches.shape
    out_c = w_mat.shape[1]
    kd_pad = round_up(Kd, 128)
    c_pad = round_up(out_c, 128)

    # ----- tiling over M -----
    if use_bn:
        if M <= TILE_M_MAX:
            tile_m, two_pass = round_up(M, 8), False          # single tile -> single-pass BN
        else:
            tile_m, two_pass = TILE_M_MULTI, True
    else:
        two_pass = False
        if M > TILE_M_MAX:
            tile_m = TILE_M_MULTI
        elif M >= SPLIT_MIN_M:
            tile_m = round_up((M + 1) // 2, 8)                # 2 tiles -> v7x megacore gets work
        else:
            tile_m = round_up(M, 8)
    m_pad = round_up(M, tile_m)
    n_m = m_pad // tile_m

    # zero padding is inert in the matmul; padded channels carry bias/gamma/beta = 0
    patches = jnp.pad(patches, ((0, m_pad - M), (0, kd_pad - Kd))).astype(jnp.bfloat16)
    w_mat = jnp.pad(w_mat, ((0, kd_pad - Kd), (0, c_pad - out_c))).astype(jnp.bfloat16)
    params3 = jnp.stack([
        jnp.pad(bias, (0, c_pad - out_c)),
        jnp.pad(gamma, (0, c_pad - out_c)),
        jnp.pad(beta, (0, c_pad - out_c)),
    ]).astype(jnp.float32)                                    # (3, C_pad): one small DMA

    if not two_pass:
        kernel = functools.partial(conv_kernel_onepass, use_bn=use_bn, use_act=use_act,
                                   tile_m=tile_m, m_total=M)
        semantics = ("arbitrary",) if use_bn else ("parallel",)
        out = pl.pallas_call(
            kernel,
            out_shape=jax.ShapeDtypeStruct((m_pad, c_pad), out_dtype),
            grid_spec=pltpu.PrefetchScalarGridSpec(
                num_scalar_prefetch=0,
                grid=(n_m,),
                in_specs=[
                    pl.BlockSpec((tile_m, kd_pad), lambda m: (m, 0)),   # patches (bf16)
                    pl.BlockSpec((kd_pad, c_pad), lambda m: (0, 0)),    # weights (bf16)
                    pl.BlockSpec((3, c_pad), lambda m: (0, 0)),         # bias/gamma/beta
                ],
                out_specs=pl.BlockSpec((tile_m, c_pad), lambda m: (m, 0)),
            ),
            compiler_params=pltpu.CompilerParams(dimension_semantics=semantics),
        )(patches, w_mat, params3)
    else:
        kernel = functools.partial(conv_kernel_twopass, use_act=use_act, tile_m=tile_m,
                                   m_total=M, needs_mask=(m_pad != M))
        out = pl.pallas_call(
            kernel,
            out_shape=jax.ShapeDtypeStruct((m_pad, c_pad), out_dtype),
            grid_spec=pltpu.PrefetchScalarGridSpec(
                num_scalar_prefetch=0,
                grid=(2, n_m),
                in_specs=[
                    pl.BlockSpec((tile_m, kd_pad), lambda p, m: (m, 0)),
                    pl.BlockSpec((kd_pad, c_pad), lambda p, m: (0, 0)),
                    pl.BlockSpec((3, c_pad), lambda p, m: (0, 0)),
                ],
                # p*m pins the out block to 0 during the stats pass so the
                # never-written output buffer is not DMA'd back to HBM in pass 0.
                out_specs=pl.BlockSpec((tile_m, c_pad), lambda p, m: (p * m, 0)),
                scratch_shapes=[pltpu.VMEM((1, c_pad), jnp.float32),    # per-channel sum
                                pltpu.VMEM((1, c_pad), jnp.float32)],   # per-channel sumsq
            ),
            compiler_params=pltpu.CompilerParams(
                dimension_semantics=("arbitrary", "arbitrary")),
        )(patches, w_mat, params3)

    return out[:M, :out_c]


# --------------------------------- JAX glue -----------------------------------
def im2col(x_nhwc, k, stride, pad):
    """Patch matrix (N*Ho*Wo, k*k*C) with tap ordering (kh, kw, C).  Runs in XLA;
    activations are bf16 so the inflated patch matrix costs half the HBM traffic."""
    N, H, W, C = x_nhwc.shape
    xp = jnp.pad(x_nhwc, ((0, 0), (pad, pad), (pad, pad), (0, 0)))
    Ho = (H + 2 * pad - k) // stride + 1
    Wo = (W + 2 * pad - k) // stride + 1
    cols = []
    for i in range(k):
        for j in range(k):
            cols.append(xp[:, i:i + stride * Ho:stride, j:j + stride * Wo:stride, :])
    patches = jnp.stack(cols, axis=3)                      # (N, Ho, Wo, k*k, C)
    return patches.reshape(N * Ho * Wo, k * k * C), N, Ho, Wo


def init_params(key):
    """Deterministic params. Conv weights: xavier_normal_(gain=0.02). BN: gamma=1, beta=0."""
    dims = [(4, NDF), (NDF, NDF * 2), (NDF * 2, NDF * 4), (NDF * 4, NDF * 8), (NDF * 8, 1)]
    params = []
    for (in_c, out_c) in dims:
        key, kw, kb = jax.random.split(key, 3)
        fan_in, fan_out = in_c * K * K, out_c * K * K
        std = 0.02 * (2.0 / (fan_in + fan_out)) ** 0.5
        w = std * jax.random.normal(kw, (out_c, in_c, K, K), jnp.float32)   # OIHW
        bound = 1.0 / (fan_in ** 0.5)
        b = jax.random.uniform(kb, (out_c,), jnp.float32, -bound, bound)
        gamma = jnp.ones((out_c,), jnp.float32)
        beta = jnp.zeros((out_c,), jnp.float32)
        params.append((w, b, gamma, beta))
    return params


def discriminator_forward(img, mask, params):
    x = jnp.concatenate([img, mask], axis=1)                  # NCHW, C = 4
    h = jnp.transpose(x, (0, 2, 3, 1)).astype(jnp.bfloat16)   # NHWC, bf16 activations
    n_layers = len(params)
    for idx, ((w, b, gamma, beta), (stride, use_bn, use_act)) in enumerate(
            zip(params, LAYER_CFG)):
        out_c = w.shape[0]
        patches, N, Ho, Wo = im2col(h, K, stride, 1)
        Kd = patches.shape[1]
        # OIHW weight -> (kh*kw*Cin, Cout), matching the patch column ordering
        w_mat = jnp.transpose(w, (2, 3, 1, 0)).reshape(Kd, out_c)
        is_last = idx == n_layers - 1
        out = conv_layer(patches, w_mat, b, gamma, beta,
                         use_bn=use_bn, use_act=use_act,
                         out_dtype=jnp.float32 if is_last else jnp.bfloat16)
        h = out.reshape(N, Ho, Wo, out_c)
    return jnp.transpose(h, (0, 3, 1, 2))                     # back to NCHW (f32)


# ----------------------------- pure-JAX reference ------------------------------
def reference_forward(img, mask, params):
    h = jnp.concatenate([img, mask], axis=1)
    for (w, b, gamma, beta), (stride, use_bn, use_act) in zip(params, LAYER_CFG):
        h = lax.conv_general_dilated(
            h, w, (stride, stride), [(1, 1), (1, 1)],
            dimension_numbers=("NCHW", "OIHW", "NCHW"),
        ) + b[None, :, None, None]
        if use_bn:
            mean = jnp.mean(h, axis=(0, 2, 3), keepdims=True)
            var = jnp.mean((h - mean) ** 2, axis=(0, 2, 3), keepdims=True)
            h = (h - mean) * lax.rsqrt(var + EPS) * gamma[None, :, None, None] \
                + beta[None, :, None, None]
        if use_act:
            h = jnp.where(h > 0, h, ALPHA * h)
    return h


# ------------------------------------ main -------------------------------------
if __name__ == "__main__":
    key = jax.random.PRNGKey(0)
    kp, ki, km = jax.random.split(key, 3)
    params = init_params(kp)

    # Small shapes: 32x32 so the last Conv(k4, s1, p1) still has a valid output.
    img = jax.random.normal(ki, (2, 3, 32, 32), jnp.float32)
    mask = jax.random.normal(km, (2, 1, 32, 32), jnp.float32)

    out = jax.jit(discriminator_forward)(img, mask, params)
    out = jax.block_until_ready(out)

    ref = reference_forward(img, mask, params)
    assert out.shape == ref.shape == (2, 1, 1, 1), (out.shape, ref.shape)
    # tolerance allows for bf16 MXU inputs / bf16 inter-layer activations
    assert jnp.allclose(out, ref, rtol=2e-2, atol=3e-3), (
        float(jnp.max(jnp.abs(out - ref))))

    print("KERNEL_OK")
</pallas_src>

<mosaic_0001>
module attributes {stable_mosaic.version = 11 : i64} {
  func.func @conv_kernel_onepass(%arg0: i32, %arg1: memref<256x128xbf16, #tpu.memory_space<vmem>>, %arg2: memref<128x128xbf16, #tpu.memory_space<vmem>>, %arg3: memref<3x128xf32, #tpu.memory_space<vmem>>, %arg4: memref<256x128xbf16, #tpu.memory_space<vmem>>) attributes {dimension_semantics = [#tpu.dimension_semantics<parallel>], iteration_bounds = array<i64: 2>, scalar_prefetch = 0 : i64, scratch_operands = 0 : i64, tpu.core_type = #tpu.core_type<tc>, window_params = [{transform_indices = @transform_0, window_bounds = array<i64: 256, 128>}, {pipeline_mode = #tpu.pipeline_mode<synchronous>, transform_indices = @transform_1, window_bounds = array<i64: 128, 128>}, {pipeline_mode = #tpu.pipeline_mode<synchronous>, transform_indices = @transform_2, window_bounds = array<i64: 3, 128>}, {transform_indices = @transform_3, window_bounds = array<i64: 256, 128>}]} {
    %c0 = arith.constant 0 : index
    %c0_0 = arith.constant 0 : index
    %0 = vector.load %arg1[%c0, %c0_0] : memref<256x128xbf16, #tpu.memory_space<vmem>>, vector<256x128xbf16>
    %c0_1 = arith.constant 0 : index
    %c0_2 = arith.constant 0 : index
    %1 = vector.load %arg2[%c0_1, %c0_2] : memref<128x128xbf16, #tpu.memory_space<vmem>>, vector<128x128xbf16>
    %cst = arith.constant dense<0.000000e+00> : vector<256x128xf32>
    %2 = tpu.matmul %0, %1, %cst {dimension_numbers = #tpu.dot_dimension_numbers<[1], [0], [0], [1], [0, 0, 1, 1], [], []>} : vector<256x128xbf16>, vector<128x128xbf16>, vector<256x128xf32> -> vector<256x128xf32>
    %c0_3 = arith.constant 0 : index
    %c0_4 = arith.constant 0 : index
    %3 = vector.load %arg3[%c0_3, %c0_4] : memref<3x128xf32, #tpu.memory_space<vmem>>, vector<3x128xf32>
    %4 = vector.extract_strided_slice %3 {offsets = [0, 0], sizes = [1, 128], strides = [1, 1]} : vector<3x128xf32> to vector<1x128xf32>
    %5 = vector.broadcast %4 : vector<1x128xf32> to vector<256x128xf32>
    %6 = arith.addf %2, %5 : vector<256x128xf32>
    %cst_5 = arith.constant 0.000000e+00 : f32
    %7 = vector.broadcast %cst_5 : f32 to vector<256x128xf32>
    %8 = arith.cmpf ogt, %6, %7 : vector<256x128xf32>
    %cst_6 = arith.constant 2.000000e-01 : f32
    %9 = vector.broadcast %cst_6 : f32 to vector<256x128xf32>
    %10 = arith.mulf %9, %6 : vector<256x128xf32>
    %11 = arith.select %8, %6, %10 : vector<256x128xi1>, vector<256x128xf32>
    %12 = arith.truncf %11 : vector<256x128xf32> to vector<256x128xbf16>
    %c0_7 = arith.constant 0 : index
    %c0_8 = arith.constant 0 : index
    %13 = vector.load %arg4[%c0_7, %c0_8] : memref<256x128xbf16, #tpu.memory_space<vmem>>, vector<256x128xbf16>
    tpu.vector_store %arg4[%c0_7, %c0_8], %12 {strides = array<i32>} : memref<256x128xbf16, #tpu.memory_space<vmem>>, vector<256x128xbf16>,
    return
  }
  func.func @transform_0(%arg0: i32) -> (i32, i32) {
    %c0_i32 = arith.constant 0 : i32
    %c0_i32_0 = arith.constant 0 : i32
    return %arg0, %c0_i32 : i32, i32
  }
  func.func @transform_1(%arg0: i32) -> (i32, i32) {
    %c0_i32 = arith.constant 0 : i32
    %c0_i32_0 = arith.constant 0 : i32
    %c0_i32_1 = arith.constant 0 : i32
    return %c0_i32, %c0_i32_0 : i32, i32
  }
  func.func @transform_2(%arg0: i32) -> (i32, i32) {
    %c0_i32 = arith.constant 0 : i32
    %c0_i32_0 = arith.constant 0 : i32
    %c0_i32_1 = arith.constant 0 : i32
    return %c0_i32, %c0_i32_0 : i32, i32
  }
  func.func @transform_3(%arg0: i32) -> (i32, i32) {
    %c0_i32 = arith.constant 0 : i32
    %c0_i32_0 = arith.constant 0 : i32
    return %arg0, %c0_i32 : i32, i32
  }
}

module attributes {stable_mosaic.version = 11 : i64} {
  func.func @conv_kernel_onepass(%arg0: i32, %arg1: memref<128x128xbf16, #tpu.memory_space<vmem>>, %arg2: memref<128x128xbf16, #tpu.memory_space<vmem>>, %arg3: memref<3x128xf32, #tpu.memory_space<vmem>>, %arg4: memref<128x128xbf16, #tpu.memory_space<vmem>>) attributes {dimension_semantics = [#tpu.dimension_semantics<arbitrary>], iteration_bounds = array<i64: 1>, scalar_prefetch = 0 : i64, scratch_operands = 0 : i64, tpu.core_type = #tpu.core_type<tc>, window_params = [{transform_indices = @transform_0, window_bounds = array<i64: 128, 128>}, {pipeline_mode = #tpu.pipeline_mode<synchronous>, transform_indices = @transform_1, window_bounds = array<i64: 128, 128>}, {pipeline_mode = #tpu.pipeline_mode<synchronous>, transform_indices = @transform_2, window_bounds = array<i64: 3, 128>}, {transform_indices = @transform_3, window_bounds = array<i64: 128, 128>}]} {
    %c0 = arith.constant 0 : index
    %c0_0 = arith.constant 0 : index
    %0 = vector.load %arg1[%c0, %c0_0] : memref<128x128xbf16, #tpu.memory_space<vmem>>, vector<128x128xbf16>
    %c0_1 = arith.constant 0 : index
    %c0_2 = arith.constant 0 : index
    %1 = vector.load %arg2[%c0_1, %c0_2] : memref<128x128xbf16, #tpu.memory_space<vmem>>, vector<128x128xbf16>
    %cst = arith.constant dense<0.000000e+00> : vector<128x128xf32>
    %2 = tpu.matmul %0, %1, %cst {dimension_numbers = #tpu.dot_dimension_numbers<[1], [0], [0], [1], [0, 0, 1, 1], [], []>} : vector<128x128xbf16>, vector<128x128xbf16>, vector<128x128xf32> -> vector<128x128xf32>
    %c0_3 = arith.constant 0 : index
    %c0_4 = arith.constant 0 : index
    %3 = vector.load %arg3[%c0_3, %c0_4] : memref<3x128xf32, #tpu.memory_space<vmem>>, vector<3x128xf32>
    %cst_5 = arith.constant dense<0.000000e+00> : vector<128xf32>
    %4 = vector.multi_reduction <add>, %2, %cst_5 [0] : vector<128x128xf32> to vector<128xf32>
    %5 = vector.shape_cast %4 : vector<128xf32> to vector<1x128xf32>
    %cst_6 = arith.constant 7.812500e-03 : f32
    %6 = vector.broadcast %cst_6 : f32 to vector<1x128xf32>
    %7 = arith.mulf %5, %6 : vector<1x128xf32>
    %8 = vector.broadcast %7 : vector<1x128xf32> to vector<128x128xf32>
    %9 = arith.subf %2, %8 : vector<128x128xf32>
    %10 = arith.mulf %9, %9 : vector<128x128xf32>
    %cst_7 = arith.constant dense<0.000000e+00> : vector<128xf32>
    %11 = vector.multi_reduction <add>, %10, %cst_7 [0] : vector<128x128xf32> to vector<128xf32>
    %12 = vector.shape_cast %11 : vector<128xf32> to vector<1x128xf32>
    %cst_8 = arith.constant 7.812500e-03 : f32
    %13 = vector.broadcast %cst_8 : f32 to vector<1x128xf32>
    %14 = arith.mulf %12, %13 : vector<1x128xf32>
    %15 = vector.extract_strided_slice %3 {offsets = [1, 0], sizes = [1, 128], strides = [1, 1]} : vector<3x128xf32> to vector<1x128xf32>
    %cst_9 = arith.constant 9.99999974E-6 : f32
    %16 = vector.broadcast %cst_9 : f32 to vector<1x128xf32>
    %17 = arith.addf %14, %16 : vector<1x128xf32>
    %18 = math.rsqrt %17 : vector<1x128xf32>
    %19 = arith.mulf %15, %18 : vector<1x128xf32>
    %20 = vector.broadcast %19 : vector<1x128xf32> to vector<128x128xf32>
    %21 = arith.mulf %9, %20 : vector<128x128xf32>
    %22 = vector.extract_strided_slice %3 {offsets = [2, 0], sizes = [1, 128], strides = [1, 1]} : vector<3x128xf32> to vector<1x128xf32>
    %23 = vector.broadcast %22 : vector<1x128xf32> to vector<128x128xf32>
    %24 = arith.addf %21, %23 : vector<128x128xf32>
    %cst_10 = arith.constant 0.000000e+00 : f32
    %25 = vector.broadcast %cst_10 : f32 to vector<128x128xf32>
    %26 = arith.cmpf ogt, %24, %25 : vector<128x128xf32>
    %cst_11 = arith.constant 2.000000e-01 : f32
    %27 = vector.broadcast %cst_11 : f32 to vector<128x128xf32>
    %28 = arith.mulf %27, %24 : vector<128x128xf32>
    %29 = arith.select %26, %24, %28 : vector<128x128xi1>, vector<128x128xf32>
    %30 = arith.truncf %29 : vector<128x128xf32> to vector<128x128xbf16>
    %c0_12 = arith.constant 0 : index
    %c0_13 = arith.constant 0 : index
    %31 = vector.load %arg4[%c0_12, %c0_13] : memref<128x128xbf16, #tpu.memory_space<vmem>>, vector<128x128xbf16>
    tpu.vector_store %arg4[%c0_12, %c0_13], %30 {strides = array<i32>} : memref<128x128xbf16, #tpu.memory_space<vmem>>, vector<128x128xbf16>,
    return
  }
  func.func @transform_0(%arg0: i32) -> (i32, i32) {
    %c0_i32 = arith.constant 0 : i32
    %c0_i32_0 = arith.constant 0 : i32
    return %arg0, %c0_i32 : i32, i32
  }
  func.func @transform_1(%arg0: i32) -> (i32, i32) {
    %c0_i32 = arith.constant 0 : i32
    %c0_i32_0 = arith.constant 0 : i32
    %c0_i32_1 = arith.constant 0 : i32
    return %c0_i32, %c0_i32_0 : i32, i32
  }
  func.func @transform_2(%arg0: i32) -> (i32, i32) {
    %c0_i32 = arith.constant 0 : i32
    %c0_i32_0 = arith.constant 0 : i32
    %c0_i32_1 = arith.constant 0 : i32
    return %c0_i32, %c0_i32_0 : i32, i32
  }
  func.func @transform_3(%arg0: i32) -> (i32, i32) {
    %c0_i32 = arith.constant 0 : i32
    %c0_i32_0 = arith.constant 0 : i32
    return %arg0, %c0_i32 : i32, i32
  }
}

module attributes {stable_mosaic.version = 11 : i64} {
  func.func @conv_kernel_onepass(%arg0: i32, %arg1: memref<32x256xbf16, #tpu.memory_space<vmem>>, %arg2: memref<256x128xbf16, #tpu.memory_space<vmem>>, %arg3: memref<3x128xf32, #tpu.memory_space<vmem>>, %arg4: memref<32x128xbf16, #tpu.memory_space<vmem>>) attributes {dimension_semantics = [#tpu.dimension_semantics<arbitrary>], iteration_bounds = array<i64: 1>, scalar_prefetch = 0 : i64, scratch_operands = 0 : i64, tpu.core_type = #tpu.core_type<tc>, window_params = [{transform_indices = @transform_0, window_bounds = array<i64: 32, 256>}, {pipeline_mode = #tpu.pipeline_mode<synchronous>, transform_indices = @transform_1, window_bounds = array<i64: 256, 128>}, {pipeline_mode = #tpu.pipeline_mode<synchronous>, transform_indices = @transform_2, window_bounds = array<i64: 3, 128>}, {transform_indices = @transform_3, window_bounds = array<i64: 32, 128>}]} {
    %c0 = arith.constant 0 : index
    %c0_0 = arith.constant 0 : index
    %0 = vector.load %arg1[%c0, %c0_0] : memref<32x256xbf16, #tpu.memory_space<vmem>>, vector<32x256xbf16>
    %c0_1 = arith.constant 0 : index
    %c0_2 = arith.constant 0 : index
    %1 = vector.load %arg2[%c0_1, %c0_2] : memref<256x128xbf16, #tpu.memory_space<vmem>>, vector<256x128xbf16>
    %cst = arith.constant dense<0.000000e+00> : vector<32x128xf32>
    %2 = tpu.matmul %0, %1, %cst {dimension_numbers = #tpu.dot_dimension_numbers<[1], [0], [0], [1], [0, 0, 1, 1], [], []>} : vector<32x256xbf16>, vector<256x128xbf16>, vector<32x128xf32> -> vector<32x128xf32>
    %c0_3 = arith.constant 0 : index
    %c0_4 = arith.constant 0 : index
    %3 = vector.load %arg3[%c0_3, %c0_4] : memref<3x128xf32, #tpu.memory_space<vmem>>, vector<3x128xf32>
    %cst_5 = arith.constant dense<0.000000e+00> : vector<128xf32>
    %4 = vector.multi_reduction <add>, %2, %cst_5 [0] : vector<32x128xf32> to vector<128xf32>
    %5 = vector.shape_cast %4 : vector<128xf32> to vector<1x128xf32>
    %cst_6 = arith.constant 3.125000e-02 : f32
    %6 = vector.broadcast %cst_6 : f32 to vector<1x128xf32>
    %7 = arith.mulf %5, %6 : vector<1x128xf32>
    %8 = vector.broadcast %7 : vector<1x128xf32> to vector<32x128xf32>
    %9 = arith.subf %2, %8 : vector<32x128xf32>
    %10 = arith.mulf %9, %9 : vector<32x128xf32>
    %cst_7 = arith.constant dense<0.000000e+00> : vector<128xf32>
    %11 = vector.multi_reduction <add>, %10, %cst_7 [0] : vector<32x128xf32> to vector<128xf32>
    %12 = vector.shape_cast %11 : vector<128xf32> to vector<1x128xf32>
    %cst_8 = arith.constant 3.125000e-02 : f32
    %13 = vector.broadcast %cst_8 : f32 to vector<1x128xf32>
    %14 = arith.mulf %12, %13 : vector<1x128xf32>
    %15 = vector.extract_strided_slice %3 {offsets = [1, 0], sizes = [1, 128], strides = [1, 1]} : vector<3x128xf32> to vector<1x128xf32>
    %cst_9 = arith.constant 9.99999974E-6 : f32
    %16 = vector.broadcast %cst_9 : f32 to vector<1x128xf32>
    %17 = arith.addf %14, %16 : vector<1x128xf32>
    %18 = math.rsqrt %17 : vector<1x128xf32>
    %19 = arith.mulf %15, %18 : vector<1x128xf32>
    %20 = vector.broadcast %19 : vector<1x128xf32> to vector<32x128xf32>
    %21 = arith.mulf %9, %20 : vector<32x128xf32>
    %22 = vector.extract_strided_slice %3 {offsets = [2, 0], sizes = [1, 128], strides = [1, 1]} : vector<3x128xf32> to vector<1x128xf32>
    %23 = vector.broadcast %22 : vector<1x128xf32> to vector<32x128xf32>
    %24 = arith.addf %21, %23 : vector<32x128xf32>
    %cst_10 = arith.constant 0.000000e+00 : f32
    %25 = vector.broadcast %cst_10 : f32 to vector<32x128xf32>
    %26 = arith.cmpf ogt, %24, %25 : vector<32x128xf32>
    %cst_11 = arith.constant 2.000000e-01 : f32
    %27 = vector.broadcast %cst_11 : f32 to vector<32x128xf32>
    %28 = arith.mulf %27, %24 : vector<32x128xf32>
    %29 = arith.select %26, %24, %28 : vector<32x128xi1>, vector<32x128xf32>
    %30 = arith.truncf %29 : vector<32x128xf32> to vector<32x128xbf16>
    %c0_12 = arith.constant 0 : index
    %c0_13 = arith.constant 0 : index
    %31 = vector.load %arg4[%c0_12, %c0_13] : memref<32x128xbf16, #tpu.memory_space<vmem>>, vector<32x128xbf16>
    tpu.vector_store %arg4[%c0_12, %c0_13], %30 {strides = array<i32>} : memref<32x128xbf16, #tpu.memory_space<vmem>>, vector<32x128xbf16>,
    return
  }
  func.func @transform_0(%arg0: i32) -> (i32, i32) {
    %c0_i32 = arith.constant 0 : i32
    %c0_i32_0 = arith.constant 0 : i32
    return %arg0, %c0_i32 : i32, i32
  }
  func.func @transform_1(%arg0: i32) -> (i32, i32) {
    %c0_i32 = arith.constant 0 : i32
    %c0_i32_0 = arith.constant 0 : i32
    %c0_i32_1 = arith.constant 0 : i32
    return %c0_i32, %c0_i32_0 : i32, i32
  }
  func.func @transform_2(%arg0: i32) -> (i32, i32) {
    %c0_i32 = arith.constant 0 : i32
    %c0_i32_0 = arith.constant 0 : i32
    %c0_i32_1 = arith.constant 0 : i32
    return %c0_i32, %c0_i32_0 : i32, i32
  }
  func.func @transform_3(%arg0: i32) -> (i32, i32) {
    %c0_i32 = arith.constant 0 : i32
    %c0_i32_0 = arith.constant 0 : i32
    return %arg0, %c0_i32 : i32, i32
  }
}

module attributes {stable_mosaic.version = 11 : i64} {
  func.func @conv_kernel_onepass(%arg0: i32, %arg1: memref<8x512xbf16, #tpu.memory_space<vmem>>, %arg2: memref<512x128xbf16, #tpu.memory_space<vmem>>, %arg3: memref<3x128xf32, #tpu.memory_space<vmem>>, %arg4: memref<8x128xbf16, #tpu.memory_space<vmem>>) attributes {dimension_semantics = [#tpu.dimension_semantics<arbitrary>], iteration_bounds = array<i64: 1>, scalar_prefetch = 0 : i64, scratch_operands = 0 : i64, tpu.core_type = #tpu.core_type<tc>, window_params = [{transform_indices = @transform_0, window_bounds = array<i64: 8, 512>}, {pipeline_mode = #tpu.pipeline_mode<synchronous>, transform_indices = @transform_1, window_bounds = array<i64: 512, 128>}, {pipeline_mode = #tpu.pipeline_mode<synchronous>, transform_indices = @transform_2, window_bounds = array<i64: 3, 128>}, {transform_indices = @transform_3, window_bounds = array<i64: 8, 128>}]} {
    %c0 = arith.constant 0 : index
    %c0_0 = arith.constant 0 : index
    %0 = vector.load %arg1[%c0, %c0_0] : memref<8x512xbf16, #tpu.memory_space<vmem>>, vector<8x512xbf16>
    %c0_1 = arith.constant 0 : index
    %c0_2 = arith.constant 0 : index
    %1 = vector.load %arg2[%c0_1, %c0_2] : memref<512x128xbf16, #tpu.memory_space<vmem>>, vector<512x128xbf16>
    %cst = arith.constant dense<0.000000e+00> : vector<8x128xf32>
    %2 = tpu.matmul %0, %1, %cst {dimension_numbers = #tpu.dot_dimension_numbers<[1], [0], [0], [1], [0, 0, 1, 1], [], []>} : vector<8x512xbf16>, vector<512x128xbf16>, vector<8x128xf32> -> vector<8x128xf32>
    %c0_3 = arith.constant 0 : index
    %c0_4 = arith.constant 0 : index
    %3 = vector.load %arg3[%c0_3, %c0_4] : memref<3x128xf32, #tpu.memory_space<vmem>>, vector<3x128xf32>
    %cst_5 = arith.constant dense<0.000000e+00> : vector<128xf32>
    %4 = vector.multi_reduction <add>, %2, %cst_5 [0] : vector<8x128xf32> to vector<128xf32>
    %5 = vector.shape_cast %4 : vector<128xf32> to vector<1x128xf32>
    %cst_6 = arith.constant 1.250000e-01 : f32
    %6 = vector.broadcast %cst_6 : f32 to vector<1x128xf32>
    %7 = arith.mulf %5, %6 : vector<1x128xf32>
    %8 = vector.broadcast %7 : vector<1x128xf32> to vector<8x128xf32>
    %9 = arith.subf %2, %8 : vector<8x128xf32>
    %10 = arith.mulf %9, %9 : vector<8x128xf32>
    %cst_7 = arith.constant dense<0.000000e+00> : vector<128xf32>
    %11 = vector.multi_reduction <add>, %10, %cst_7 [0] : vector<8x128xf32> to vector<128xf32>
    %12 = vector.shape_cast %11 : vector<128xf32> to vector<1x128xf32>
    %cst_8 = arith.constant 1.250000e-01 : f32
    %13 = vector.broadcast %cst_8 : f32 to vector<1x128xf32>
    %14 = arith.mulf %12, %13 : vector<1x128xf32>
    %15 = vector.extract_strided_slice %3 {offsets = [1, 0], sizes = [1, 128], strides = [1, 1]} : vector<3x128xf32> to vector<1x128xf32>
    %cst_9 = arith.constant 9.99999974E-6 : f32
    %16 = vector.broadcast %cst_9 : f32 to vector<1x128xf32>
    %17 = arith.addf %14, %16 : vector<1x128xf32>
    %18 = math.rsqrt %17 : vector<1x128xf32>
    %19 = arith.mulf %15, %18 : vector<1x128xf32>
    %20 = vector.broadcast %19 : vector<1x128xf32> to vector<8x128xf32>
    %21 = arith.mulf %9, %20 : vector<8x128xf32>
    %22 = vector.extract_strided_slice %3 {offsets = [2, 0], sizes = [1, 128], strides = [1, 1]} : vector<3x128xf32> to vector<1x128xf32>
    %23 = vector.broadcast %22 : vector<1x128xf32> to vector<8x128xf32>
    %24 = arith.addf %21, %23 : vector<8x128xf32>
    %cst_10 = arith.constant 0.000000e+00 : f32
    %25 = vector.broadcast %cst_10 : f32 to vector<8x128xf32>
    %26 = arith.cmpf ogt, %24, %25 : vector<8x128xf32>
    %cst_11 = arith.constant 2.000000e-01 : f32
    %27 = vector.broadcast %cst_11 : f32 to vector<8x128xf32>
    %28 = arith.mulf %27, %24 : vector<8x128xf32>
    %29 = arith.select %26, %24, %28 : vector<8x128xi1>, vector<8x128xf32>
    %30 = arith.truncf %29 : vector<8x128xf32> to vector<8x128xbf16>
    %c0_12 = arith.constant 0 : index
    %c0_13 = arith.constant 0 : index
    %31 = vector.load %arg4[%c0_12, %c0_13] : memref<8x128xbf16, #tpu.memory_space<vmem>>, vector<8x128xbf16>
    tpu.vector_store %arg4[%c0_12, %c0_13], %30 {strides = array<i32>} : memref<8x128xbf16, #tpu.memory_space<vmem>>, vector<8x128xbf16>,
    return
  }
  func.func @transform_0(%arg0: i32) -> (i32, i32) {
    %c0_i32 = arith.constant 0 : i32
    %c0_i32_0 = arith.constant 0 : i32
    return %arg0, %c0_i32 : i32, i32
  }
  func.func @transform_1(%arg0: i32) -> (i32, i32) {
    %c0_i32 = arith.constant 0 : i32
    %c0_i32_0 = arith.constant 0 : i32
    %c0_i32_1 = arith.constant 0 : i32
    return %c0_i32, %c0_i32_0 : i32, i32
  }
  func.func @transform_2(%arg0: i32) -> (i32, i32) {
    %c0_i32 = arith.constant 0 : i32
    %c0_i32_0 = arith.constant 0 : i32
    %c0_i32_1 = arith.constant 0 : i32
    return %c0_i32, %c0_i32_0 : i32, i32
  }
  func.func @transform_3(%arg0: i32) -> (i32, i32) {
    %c0_i32 = arith.constant 0 : i32
    %c0_i32_0 = arith.constant 0 : i32
    return %arg0, %c0_i32 : i32, i32
  }
}

module attributes {stable_mosaic.version = 11 : i64} {
  func.func @conv_kernel_onepass(%arg0: i32, %arg1: memref<8x1024xbf16, #tpu.memory_space<vmem>>, %arg2: memref<1024x128xbf16, #tpu.memory_space<vmem>>, %arg3: memref<3x128xf32, #tpu.memory_space<vmem>>, %arg4: memref<8x128xf32, #tpu.memory_space<vmem>>) attributes {dimension_semantics = [#tpu.dimension_semantics<parallel>], iteration_bounds = array<i64: 1>, scalar_prefetch = 0 : i64, scratch_operands = 0 : i64, tpu.core_type = #tpu.core_type<tc>, window_params = [{transform_indices = @transform_0, window_bounds = array<i64: 8, 1024>}, {pipeline_mode = #tpu.pipeline_mode<synchronous>, transform_indices = @transform_1, window_bounds = array<i64: 1024, 128>}, {pipeline_mode = #tpu.pipeline_mode<synchronous>, transform_indices = @transform_2, window_bounds = array<i64: 3, 128>}, {transform_indices = @transform_3, window_bounds = array<i64: 8, 128>}]} {
    %c0 = arith.constant 0 : index
    %c0_0 = arith.constant 0 : index
    %0 = vector.load %arg1[%c0, %c0_0] : memref<8x1024xbf16, #tpu.memory_space<vmem>>, vector<8x1024xbf16>
    %c0_1 = arith.constant 0 : index
    %c0_2 = arith.constant 0 : index
    %1 = vector.load %arg2[%c0_1, %c0_2] : memref<1024x128xbf16, #tpu.memory_space<vmem>>, vector<1024x128xbf16>
    %cst = arith.constant dense<0.000000e+00> : vector<8x128xf32>
    %2 = tpu.matmul %0, %1, %cst {dimension_numbers = #tpu.dot_dimension_numbers<[1], [0], [0], [1], [0, 0, 1, 1], [], []>} : vector<8x1024xbf16>, vector<1024x128xbf16>, vector<8x128xf32> -> vector<8x128xf32>
    %c0_3 = arith.constant 0 : index
    %c0_4 = arith.constant 0 : index
    %3 = vector.load %arg3[%c0_3, %c0_4] : memref<3x128xf32, #tpu.memory_space<vmem>>, vector<3x128xf32>
    %4 = vector.extract_strided_slice %3 {offsets = [0, 0], sizes = [1, 128], strides = [1, 1]} : vector<3x128xf32> to vector<1x128xf32>
    %5 = vector.broadcast %4 : vector<1x128xf32> to vector<8x128xf32>
    %6 = arith.addf %2, %5 : vector<8x128xf32>
    %c0_5 = arith.constant 0 : index
    %c0_6 = arith.constant 0 : index
    %7 = vector.load %arg4[%c0_5, %c0_6] : memref<8x128xf32, #tpu.memory_space<vmem>>, vector<8x128xf32>
    tpu.vector_store %arg4[%c0_5, %c0_6], %6 {strides = array<i32>} : memref<8x128xf32, #tpu.memory_space<vmem>>, vector<8x128xf32>,
    return
  }
  func.func @transform_0(%arg0: i32) -> (i32, i32) {
    %c0_i32 = arith.constant 0 : i32
    %c0_i32_0 = arith.constant 0 : i32
    return %arg0, %c0_i32 : i32, i32
  }
  func.func @transform_1(%arg0: i32) -> (i32, i32) {
    %c0_i32 = arith.constant 0 : i32
    %c0_i32_0 = arith.constant 0 : i32
    %c0_i32_1 = arith.constant 0 : i32
    return %c0_i32, %c0_i32_0 : i32, i32
  }
  func.func @transform_2(%arg0: i32) -> (i32, i32) {
    %c0_i32 = arith.constant 0 : i32
    %c0_i32_0 = arith.constant 0 : i32
    %c0_i32_1 = arith.constant 0 : i32
    return %c0_i32, %c0_i32_0 : i32, i32
  }
  func.func @transform_3(%arg0: i32) -> (i32, i32) {
    %c0_i32 = arith.constant 0 : i32
    %c0_i32_0 = arith.constant 0 : i32
    return %arg0, %c0_i32 : i32, i32
  }
}

</mosaic_0001>

<llo_original>
// kernel: discriminator_forward.5
$region0: #{discriminator_forward.5}
  #allocation0 [shape = 'u32[]', space=smem, size = 0x4, offset = 0x4, fixed_abs, tag = 'smem constant byte address 0x4 - core index']
  #allocation1 [shape = 'u32[144,128]{1,0:T(1,128)}', space=vmem, size = 0x12000, scoped, tag = 'internal scratch']
  %s0 = inlined_call_operand.vmem [shape: bf16[512,128], index: 0, kind: input, shape index: {}]
  %s1 = inlined_call_operand.vmem [shape: bf16[128,128], index: 1, kind: input, shape index: {}]
  %s2 = inlined_call_operand.vmem [shape: f32[3,128], index: 2, kind: input, shape index: {}]
  %s3 = inlined_call_operand.vmem [shape: bf16[512,128], index: 3, kind: output, shape index: {}]
  %s4 = sld [smem:[#allocation0]]
  $region45: #{discriminator_forward.5} parent=0
    _
  %s6 = ssub.s32 1, %s4
  %s7 = scalar_select 0, %s6, %s4
  loop: start=0, step=1, limit=4
  $region2: #{discriminator_forward.5} parent=0 // loop_pre_header
    _
  $region3: #{discriminator_forward.5} parent=0 // loop_header
    %s9 = sphi 0, %s13
    %p10 = scmp.ge.s32.totalorder %s9, 4
    %s19 = sphi 0, %s21
    %s22 = sphi 0, %s19
    %s23 = sphi 0, %s22
    %s39 = sphi 0, %s23
    %s43 = sphi 0, %s43
    %s45 = sphi 0, %s43
    %s46 = sphi 0, %s45
    %s60 = sphi 0, %s46
    %s64 = sphi 0, %s64
    %s66 = sphi 0, %s64
    %s67 = sphi 0, %s66
    %s81 = sphi 0, %s67
    %s87 = sphi 0, %s89
    %s90 = sphi 0, %s87
    %s91 = sphi 0, %s90
    %s107 = sphi 0, %s91
  $region4: #{discriminator_forward.5} parent=0 // loop_header_branch
    %12 = sbr.rel (%p10) target = $region8
  $region5: #{discriminator_forward.5} parent=0 // loop_body
    %s14 = ssub.s32 %s9, 1
    %s15 = ssub.s32 %s9, 2
    %s16 = sadd.s32 %s9, 1
    %s17 = ssub.s32 %s9, %s16
    %p18 = scmp.eq.s32.totalorder %s17, 0
    %s20 = sadd.s32 %s19, 1
    %s21 = scalar_select %p18, %s19, %s20
    %p24 = pneg %p18
    %p25 = scmp.eq.s32.totalorder %s9, 1
    %p26 = por %p24, %p25
    %p27 = scmp.ne.s32.totalorder %s19, %s22
    %p28 = scmp.eq.s32.totalorder %s9, 0
    %p29 = por %p27, %p28
    %p30 = scmp.ne.s32.totalorder %s19, %s22
    %p31 = scmp.eq.s32.totalorder %s14, 1
    %p32 = por %p30, %p31
    %p33 = scmp.ne.s32.totalorder %s22, %s23
    %p34 = scmp.eq.s32.totalorder %s14, 0
    %p35 = por %p33, %p34
    %p36 = scmp.ne.s32.totalorder %s22, %s23
    %p37 = scmp.eq.s32.totalorder %s15, 1
    %p38 = por %p36, %p37
    %p40 = scmp.ne.s32.totalorder %s23, %s39
    %p41 = scmp.eq.s32.totalorder %s15, 0
    %p42 = por %p40, %p41
    %s44 = sadd.s32 %s43, 1
    %p47 = scmp.eq.s32.totalorder %s9, 1
    %p48 = scmp.ne.s32.totalorder %s43, %s45
    %p49 = scmp.eq.s32.totalorder %s9, 0
    %p50 = por %p48, %p49
    %p51 = scmp.ne.s32.totalorder %s43, %s45
    %p52 = scmp.eq.s32.totalorder %s14, 1
    %p53 = por %p51, %p52
    %p54 = scmp.ne.s32.totalorder %s45, %s46
    %p55 = scmp.eq.s32.totalorder %s14, 0
    %p56 = por %p54, %p55
    %p57 = scmp.ne.s32.totalorder %s45, %s46
    %p58 = scmp.eq.s32.totalorder %s15, 1
    %p59 = por %p57, %p58
    %p61 = scmp.ne.s32.totalorder %s46, %s60
    %p62 = scmp.eq.s32.totalorder %s15, 0
    %p63 = por %p61, %p62
    %s65 = sadd.s32 %s64, 1
    %p68 = scmp.eq.s32.totalorder %s9, 1
    %p69 = scmp.ne.s32.totalorder %s64, %s66
    %p70 = scmp.eq.s32.totalorder %s9, 0
    %p71 = por %p69, %p70
    %p72 = scmp.ne.s32.totalorder %s64, %s66
    %p73 = scmp.eq.s32.totalorder %s14, 1
    %p74 = por %p72, %p73
    %p75 = scmp.ne.s32.totalorder %s66, %s67
    %p76 = scmp.eq.s32.totalorder %s14, 0
    %p77 = por %p75, %p76
    %p78 = scmp.ne.s32.totalorder %s66, %s67
    %p79 = scmp.eq.s32.totalorder %s15, 1
    %p80 = por %p78, %p79
    %p82 = scmp.ne.s32.totalorder %s67, %s81
    %p83 = scmp.eq.s32.totalorder %s15, 0
    %p84 = por %p82, %p83
    %s85 = ssub.s32 %s9, %s16
    %p86 = scmp.eq.s32.totalorder %s85, 0
    %s88 = sadd.s32 %s87, 1
    %s89 = scalar_select %p86, %s87, %s88
    %p92 = pneg %p86
    %p93 = scmp.eq.s32.totalorder %s9, 1
    %p94 = por %p92, %p93
    %p95 = scmp.ne.s32.totalorder %s87, %s90
    %p96 = scmp.eq.s32.totalorder %s9, 0
    %p97 = por %p95, %p96
    %p98 = scmp.ne.s32.totalorder %s87, %s90
    %p99 = scmp.eq.s32.totalorder %s14, 1
    %p100 = por %p98, %p99
    %p101 = scmp.ne.s32.totalorder %s90, %s91
    %p102 = scmp.eq.s32.totalorder %s14, 0
    %p103 = por %p101, %p102
    %p104 = scmp.ne.s32.totalorder %s90, %s91
    %p105 = scmp.eq.s32.totalorder %s15, 1
    %p106 = por %p104, %p105
    %p108 = scmp.ne.s32.totalorder %s91, %s107
    %p109 = scmp.eq.s32.totalorder %s15, 0
    %p110 = por %p108, %p109
    %p111 = scmp.le.s32.totalorder 1, %s9
    %p112 = scmp.lt.s32.totalorder %s9, 3
    %p113 = pnand %p111, %p112
    %p114 = pneg %p113
    // Predicated region
    $region9: #{discriminator_forward.5} parent=5 // pred_check
      _
    $region10: #{discriminator_forward.5} parent=5 // pred_check_branch
      %116 = sbr.rel (%p113) target = $region12
    $region11: #{discriminator_forward.5} parent=5 // pred_region
      %s117 = ssub.s32 %s9, 1
      // Predicated region
      $region13: #{discriminator_forward.5} parent=11 // pred_check
        %p118 = pneg %p56
      $region14: #{discriminator_forward.5} parent=11 // pred_check_branch
        %120 = sbr.rel (%p118) target = $region16
      $region15: #{discriminator_forward.5} parent=11 // pred_region
        _
      $region16: #{discriminator_forward.5} parent=11 // pred_fallthru
        _
      // Predicated region
      $region17: #{discriminator_forward.5} parent=11 // pred_check
        %p121 = pneg %p77
      $region18: #{discriminator_forward.5} parent=11 // pred_check_branch
        %123 = sbr.rel (%p121) target = $region20
      $region19: #{discriminator_forward.5} parent=11 // pred_region
        _
      $region20: #{discriminator_forward.5} parent=11 // pred_fallthru
        _
    $region12: #{discriminator_forward.5} parent=5 // pred_fallthru
      _
    %p124 = scmp.lt.s32.totalorder %s9, 2
    // Predicated region
    $region21: #{discriminator_forward.5} parent=5 // pred_check
      %p125 = pneg %p124
    $region22: #{discriminator_forward.5} parent=5 // pred_check_branch
      %127 = sbr.rel (%p125) target = $region24
    $region23: #{discriminator_forward.5} parent=5 // pred_region
      // Predicated region
      $region25: #{discriminator_forward.5} parent=23 // pred_check
        %p128 = pneg %p29
      $region26: #{discriminator_forward.5} parent=23 // pred_check_branch
        %130 = sbr.rel (%p128) target = $region28
      $region27: #{discriminator_forward.5} parent=23 // pred_region
        %s131 = smul.u32 32, %s9
        %p132 = scmp.lt.s32.totalorder %s131, 63
        %s133 = scalar_select %p132, %s131, 63
        %s134 = smul.addr %s133, 4
        %s135 = scalar_lea.vmem %s0, %s134
        %s136 = smul.u32 32, %s9
      $region28: #{discriminator_forward.5} parent=23 // pred_fallthru
        _
    $region24: #{discriminator_forward.5} parent=5 // pred_fallthru
      _
    %p137 = scmp.le.s32.totalorder 1, %s9
    %p138 = scmp.lt.s32.totalorder %s9, 3
    %p139 = pnand %p137, %p138
    %p140 = pneg %p139
    // Predicated region
    $region29: #{discriminator_forward.5} parent=5 // pred_check
      _
    $region30: #{discriminator_forward.5} parent=5 // pred_check_branch
      %142 = sbr.rel (%p139) target = $region32
    $region31: #{discriminator_forward.5} parent=5 // pred_region
      %s143 = ssub.s32 %s9, 1
      %s144 = smul.u32 32, %s14
      %p145 = scmp.lt.s32.totalorder %s144, 63
      %s146 = scalar_select %p145, %s144, 63
      %s147 = smul.addr %s146, 4
      %s148 = scalar_lea.vmem %s0, %s147
      %p149 = pneg %p35
      %p150 = pneg %p32
      %p151 = pneg %p56
      %p152 = pneg %p53
      %p153 = pneg %p77
      %p154 = pneg %p74
      %p155 = pneg %p103
      %p156 = pneg %p100
      %s157 = smul.u32 32, %s14
      %p158 = scmp.lt.s32.totalorder %s157, 63
      %s159 = scalar_select %p158, %s157, 63
      %s160 = smul.addr %s159, 4
      %s161 = scalar_lea.vmem %s3, %s160
      %s162 = smul.u32 32, %s14
      %p163 = scmp.lt.s32.totalorder %s162, 63
      %s164 = scalar_select %p163, %s162, 63
      %s165 = smul.addr %s164, 4
      %s166 = scalar_lea.vmem %s0, %s165
      %s167 = smul.u32 32, %s14
      %s168 = smul.u32 32, %s14
      %p169 = scmp.lt.s32.totalorder %s168, 63
      %s170 = scalar_select %p169, %s168, 63
      %s171 = smul.addr %s170, 4
      %s172 = scalar_lea.vmem %s3, %s171
      %s173 = smul.u32 32, %s14
      %v175 = vld [vmem:[%s166] sm:$0xf]
      %v176 = vld [vmem:[%s166 + $0x4] sm:$0xf]
      %v177 = vld [vmem:[%s166 + $0x8] sm:$0xf]
      %v178 = vld [vmem:[%s166 + $0xc] sm:$0xf]
      %v179 = vld [vmem:[%s166 + $0x10] sm:$0xf]
      %v180 = vld [vmem:[%s166 + $0x14] sm:$0xf]
      %v181 = vld [vmem:[%s166 + $0x18] sm:$0xf]
      %v182 = vld [vmem:[%s166 + $0x1c] sm:$0xf]
      %v183 = vld [vmem:[%s166 + $0x20] sm:$0xf]
      %v184 = vld [vmem:[%s166 + $0x24] sm:$0xf]
      %v185 = vld [vmem:[%s166 + $0x28] sm:$0xf]
      %v186 = vld [vmem:[%s166 + $0x2c] sm:$0xf]
      %v187 = vld [vmem:[%s166 + $0x30] sm:$0xf]
      %v188 = vld [vmem:[%s166 + $0x34] sm:$0xf]
      %v189 = vld [vmem:[%s166 + $0x38] sm:$0xf]
      %v190 = vld [vmem:[%s166 + $0x3c] sm:$0xf]
      %v191 = vld [vmem:[%s166 + $0x40] sm:$0xf]
      %v192 = vld [vmem:[%s166 + $0x44] sm:$0xf]
      %v193 = vld [vmem:[%s166 + $0x48] sm:$0xf]
      %v194 = vld [vmem:[%s166 + $0x4c] sm:$0xf]
      %v195 = vld [vmem:[%s166 + $0x50] sm:$0xf]
      %v196 = vld [vmem:[%s166 + $0x54] sm:$0xf]
      %v197 = vld [vmem:[%s166 + $0x58] sm:$0xf]
      %v198 = vld [vmem:[%s166 + $0x5c] sm:$0xf]
      %v199 = vld [vmem:[%s166 + $0x60] sm:$0xf]
      %v200 = vld [vmem:[%s166 + $0x64] sm:$0xf]
      %v201 = vld [vmem:[%s166 + $0x68] sm:$0xf]
      %v202 = vld [vmem:[%s166 + $0x6c] sm:$0xf]
      %v203 = vld [vmem:[%s166 + $0x70] sm:$0xf]
      %v204 = vld [vmem:[%s166 + $0x74] sm:$0xf]
      %v205 = vld [vmem:[%s166 + $0x78] sm:$0xf]
      %v206 = vld [vmem:[%s166 + $0x7c] sm:$0xf]
      %v207 = vld [vmem:[%s1] sm:$0xf]
      %v208 = vld [vmem:[%s1 + $0x4] sm:$0xf]
      %v209 = vld [vmem:[%s1 + $0x8] sm:$0xf]
      %v210 = vld [vmem:[%s1 + $0xc] sm:$0xf]
      %v211 = vld [vmem:[%s1 + $0x10] sm:$0xf]
      %v212 = vld [vmem:[%s1 + $0x14] sm:$0xf]
      %v213 = vld [vmem:[%s1 + $0x18] sm:$0xf]
      %v214 = vld [vmem:[%s1 + $0x1c] sm:$0xf]
      %v215 = vld [vmem:[%s1 + $0x20] sm:$0xf]
      %v216 = vld [vmem:[%s1 + $0x24] sm:$0xf]
      %v217 = vld [vmem:[%s1 + $0x28] sm:$0xf]
      %v218 = vld [vmem:[%s1 + $0x2c] sm:$0xf]
      %v219 = vld [vmem:[%s1 + $0x30] sm:$0xf]
      %v220 = vld [vmem:[%s1 + $0x34] sm:$0xf]
      %v221 = vld [vmem:[%s1 + $0x38] sm:$0xf]
      %v222 = vld [vmem:[%s1 + $0x3c] sm:$0xf]
      %v223 = vld [vmem:[%s2] sm:$0x7]
      %v224 = vlaneseq
      %v225 = vshrl.u32 %v224, 7
      %v226 = vsub.s32 0, %v225
      %v227 = vrot.slane %v223, %v226
      %v260 = vunpack.c.l.b16 %v175
      %v261 = vunpack.c.l.b16 %v176
      %v262 = vunpack.c.l.b16 %v177
      %v263 = vunpack.c.l.b16 %v178
      %v264 = vunpack.c.l.b16 %v179
      %v265 = vunpack.c.l.b16 %v180
      %v266 = vunpack.c.l.b16 %v181
      %v267 = vunpack.c.l.b16 %v182
      %v268 = vunpack.c.l.b16 %v183
      %v269 = vunpack.c.l.b16 %v184
      %v270 = vunpack.c.l.b16 %v185
      %v271 = vunpack.c.l.b16 %v186
      %v272 = vunpack.c.l.b16 %v187
      %v273 = vunpack.c.l.b16 %v188
      %v274 = vunpack.c.l.b16 %v189
      %v275 = vunpack.c.l.b16 %v190
      %v276 = vunpack.c.l.b16 %v191
      %v277 = vunpack.c.l.b16 %v192
      %v278 = vunpack.c.l.b16 %v193
      %v279 = vunpack.c.l.b16 %v194
      %v280 = vunpack.c.l.b16 %v195
      %v281 = vunpack.c.l.b16 %v196
      %v282 = vunpack.c.l.b16 %v197
      %v283 = vunpack.c.l.b16 %v198
      %v284 = vunpack.c.l.b16 %v199
      %v285 = vunpack.c.l.b16 %v200
      %v286 = vunpack.c.l.b16 %v201
      %v287 = vunpack.c.l.b16 %v202
      %v288 = vunpack.c.l.b16 %v203
      %v289 = vunpack.c.l.b16 %v204
      %v290 = vunpack.c.l.b16 %v205
      %v291 = vunpack.c.l.b16 %v206
      %v292 = vpack.c.b16 %v261, %v260
      %v293 = vpack.c.b16 %v263, %v262
      %v294 = vpack.c.b16 %v265, %v264
      %v295 = vpack.c.b16 %v267, %v266
      %v296 = vpack.c.b16 %v269, %v268
      %v297 = vpack.c.b16 %v271, %v270
      %v298 = vpack.c.b16 %v273, %v272
      %v299 = vpack.c.b16 %v275, %v274
      %v300 = vpack.c.b16 %v277, %v276
      %v301 = vpack.c.b16 %v279, %v278
      %v302 = vpack.c.b16 %v281, %v280
      %v303 = vpack.c.b16 %v283, %v282
      %v304 = vpack.c.b16 %v285, %v284
      %v305 = vpack.c.b16 %v287, %v286
      %v306 = vpack.c.b16 %v289, %v288
      %v307 = vpack.c.b16 %v291, %v290
      %v340 = vunpack.c.l.b16 %v207
      %v341 = vunpack.c.l.b16 %v208
      %v342 = vunpack.c.l.b16 %v209
      %v343 = vunpack.c.l.b16 %v210
      %v344 = vunpack.c.l.b16 %v211
      %v345 = vunpack.c.l.b16 %v212
      %v346 = vunpack.c.l.b16 %v213
      %v347 = vunpack.c.l.b16 %v214
      %v348 = vunpack.c.l.b16 %v215
      %v349 = vunpack.c.l.b16 %v216
      %v350 = vunpack.c.l.b16 %v217
      %v351 = vunpack.c.l.b16 %v218
      %v352 = vunpack.c.l.b16 %v219
      %v353 = vunpack.c.l.b16 %v220
      %v354 = vunpack.c.l.b16 %v221
      %v355 = vunpack.c.l.b16 %v222
      %v356 = vpack.c.b16 %v341, %v340
      %v357 = vpack.c.b16 %v343, %v342
      %v358 = vpack.c.b16 %v345, %v344
      %v359 = vpack.c.b16 %v347, %v346
      %v360 = vpack.c.b16 %v349, %v348
      %v361 = vpack.c.b16 %v351, %v350
      %v362 = vpack.c.b16 %v353, %v352
      %v363 = vpack.c.b16 %v355, %v354
      %372 = vmatprep.subr.bf16.mxu0 0
      %373 = vmatpush1.bf16.msra.mxu0 %v356
      %374 = vmatprep.subr.bf16.mxu0 0
      %375 = vmatpush1.bf16.msra.mxu0 %v357
      %376 = vmatprep.subr.bf16.mxu0 0
      %377 = vmatpush1.bf16.msra.mxu0 %v358
      %378 = vmatprep.subr.bf16.mxu0 0
      %379 = vmatpush1.bf16.msra.mxu0 %v359
      %380 = vmatprep.subr.bf16.mxu0 0
      %381 = vmatpush1.bf16.msra.mxu0 %v360
      %382 = vmatprep.subr.bf16.mxu0 0
      %383 = vmatpush1.bf16.msra.mxu0 %v361
      %384 = vmatprep.subr.bf16.mxu0 0
      %385 = vmatpush1.bf16.msra.mxu0 %v362
      %386 = vmatprep.subr.bf16.mxu0 0
      %387 = vmatpush1.bf16.msra.mxu0 %v363
      %388 = vmatprep.subr.bf16.mxu0 0
      %389 = vmatpush1.bf16.msra.mxu0 0
      %390 = vmatprep.subr.bf16.mxu0 0
      %391 = vmatpush1.bf16.msra.mxu0 0
      %392 = vmatprep.subr.bf16.mxu0 0
      %393 = vmatpush1.bf16.msra.mxu0 0
      %394 = vmatprep.subr.bf16.mxu0 0
      %395 = vmatpush1.bf16.msra.mxu0 0
      %396 = vmatprep.subr.bf16.mxu0 0
      %397 = vmatpush1.bf16.msra.mxu0 0
      %398 = vmatprep.subr.bf16.mxu0 0
      %399 = vmatpush1.bf16.msra.mxu0 0
      %400 = vmatprep.subr.bf16.mxu0 0
      %401 = vmatpush1.bf16.msra.mxu0 0
      %402 = vmatprep.subr.bf16.mxu0 0
      %403 = vmatpush1.bf16.msra.mxu0 0
      %404 = vmatprep.mubr.bf16.mxu0 0
      %405 = vmatmul.mubr.bf16.gmra.mrb[0].mxu0 %v292
      %v406 = vpop.f32.mrb[0].mxu0
      %v407 = vadd.f32 %v227, %v406
      %v408 = vpop.f32.mrb[0].mxu0
      %v409 = vpop.f32.mrb[0].mxu0
      %v410 = vadd.f32 %v227, %v409
      %v411 = vpop.f32.mrb[0].mxu0
      %412 = vmatprep.mubr.bf16.mxu0 0
      %413 = vmatmul.mubr.bf16.gmra.mrb[0].mxu0 %v293
      %v414 = vpop.f32.mrb[0].mxu0
      %v415 = vadd.f32 %v227, %v414
      %v416 = vpop.f32.mrb[0].mxu0
      %v417 = vpop.f32.mrb[0].mxu0
      %v418 = vadd.f32 %v227, %v417
      %v419 = vpop.f32.mrb[0].mxu0
      %420 = vmatprep.mubr.bf16.mxu0 0
      %421 = vmatmul.mubr.bf16.gmra.mrb[0].mxu0 %v294
      %v422 = vpop.f32.mrb[0].mxu0
      %v423 = vadd.f32 %v227, %v422
      %v424 = vpop.f32.mrb[0].mxu0
      %v425 = vpop.f32.mrb[0].mxu0
      %v426 = vadd.f32 %v227, %v425
      %v427 = vpop.f32.mrb[0].mxu0
      %428 = vmatprep.mubr.bf16.mxu0 0
      %429 = vmatmul.mubr.bf16.gmra.mrb[0].mxu0 %v295
      %v430 = vpop.f32.mrb[0].mxu0
      %v431 = vadd.f32 %v227, %v430
      %v432 = vpop.f32.mrb[0].mxu0
      %v433 = vpop.f32.mrb[0].mxu0
      %v434 = vadd.f32 %v227, %v433
      %v435 = vpop.f32.mrb[0].mxu0
      %436 = vmatprep.mubr.bf16.mxu0 0
      %437 = vmatmul.mubr.bf16.gmra.mrb[0].mxu0 %v296
      %v438 = vpop.f32.mrb[0].mxu0
      %v439 = vadd.f32 %v227, %v438
      %v440 = vpop.f32.mrb[0].mxu0
      %v441 = vpop.f32.mrb[0].mxu0
      %v442 = vadd.f32 %v227, %v441
      %v443 = vpop.f32.mrb[0].mxu0
      %444 = vmatprep.mubr.bf16.mxu0 0
      %445 = vmatmul.mubr.bf16.gmra.mrb[0].mxu0 %v297
      %v446 = vpop.f32.mrb[0].mxu0
      %v447 = vadd.f32 %v227, %v446
      %v448 = vpop.f32.mrb[0].mxu0
      %v449 = vpop.f32.mrb[0].mxu0
      %v450 = vadd.f32 %v227, %v449
      %v451 = vpop.f32.mrb[0].mxu0
      %452 = vmatprep.mubr.bf16.mxu0 0
      %453 = vmatmul.mubr.bf16.gmra.mrb[0].mxu0 %v298
      %v454 = vpop.f32.mrb[0].mxu0
      %v455 = vadd.f32 %v227, %v454
      %v456 = vpop.f32.mrb[0].mxu0
      %v457 = vpop.f32.mrb[0].mxu0
      %v458 = vadd.f32 %v227, %v457
      %v459 = vpop.f32.mrb[0].mxu0
      %460 = vmatprep.mubr.bf16.mxu0 0
      %461 = vmatmul.mubr.bf16.gmra.mrb[0].mxu0 %v299
      %v462 = vpop.f32.mrb[0].mxu0
      %v463 = vadd.f32 %v227, %v462
      %v464 = vpop.f32.mrb[0].mxu0
      %v465 = vpop.f32.mrb[0].mxu0
      %v466 = vadd.f32 %v227, %v465
      %v467 = vpop.f32.mrb[0].mxu0
      %468 = vmatprep.mubr.bf16.mxu0 0
      %469 = vmatmul.mubr.bf16.gmra.mrb[0].mxu0 %v300
      %v470 = vpop.f32.mrb[0].mxu0
      %v471 = vadd.f32 %v227, %v470
      %v472 = vpop.f32.mrb[0].mxu0
      %v473 = vpop.f32.mrb[0].mxu0
      %v474 = vadd.f32 %v227, %v473
      %v475 = vpop.f32.mrb[0].mxu0
      %476 = vmatprep.mubr.bf16.mxu0 0
      %477 = vmatmul.mubr.bf16.gmra.mrb[0].mxu0 %v301
      %v478 = vpop.f32.mrb[0].mxu0
      %v479 = vadd.f32 %v227, %v478
      %v480 = vpop.f32.mrb[0].mxu0
      %v481 = vpop.f32.mrb[0].mxu0
      %v482 = vadd.f32 %v227, %v481
      %v483 = vpop.f32.mrb[0].mxu0
      %484 = vmatprep.mubr.bf16.mxu0 0
      %485 = vmatmul.mubr.bf16.gmra.mrb[0].mxu0 %v302
      %v486 = vpop.f32.mrb[0].mxu0
      %v487 = vadd.f32 %v227, %v486
      %v488 = vpop.f32.mrb[0].mxu0
      %v489 = vpop.f32.mrb[0].mxu0
      %v490 = vadd.f32 %v227, %v489
      %v491 = vpop.f32.mrb[0].mxu0
      %492 = vmatprep.mubr.bf16.mxu0 0
      %493 = vmatmul.mubr.bf16.gmra.mrb[0].mxu0 %v303
      %v494 = vpop.f32.mrb[0].mxu0
      %v495 = vadd.f32 %v227, %v494
      %v496 = vpop.f32.mrb[0].mxu0
      %v497 = vpop.f32.mrb[0].mxu0
      %v498 = vadd.f32 %v227, %v497
      %v499 = vpop.f32.mrb[0].mxu0
      %500 = vmatprep.mubr.bf16.mxu0 0
      %501 = vmatmul.mubr.bf16.gmra.mrb[0].mxu0 %v304
      %v502 = vpop.f32.mrb[0].mxu0
      %v503 = vadd.f32 %v227, %v502
      %v504 = vpop.f32.mrb[0].mxu0
      %v505 = vpop.f32.mrb[0].mxu0
      %v506 = vadd.f32 %v227, %v505
      %v507 = vpop.f32.mrb[0].mxu0
      %508 = vmatprep.mubr.bf16.mxu0 0
      %509 = vmatmul.mubr.bf16.gmra.mrb[0].mxu0 %v305
      %v510 = vpop.f32.mrb[0].mxu0
      %v511 = vadd.f32 %v227, %v510
      %v512 = vpop.f32.mrb[0].mxu0
      %v513 = vpop.f32.mrb[0].mxu0
      %v514 = vadd.f32 %v227, %v513
      %v515 = vpop.f32.mrb[0].mxu0
      %516 = vmatprep.mubr.bf16.mxu0 0
      %517 = vmatmul.mubr.bf16.gmra.mrb[0].mxu0 %v306
      %v518 = vpop.f32.mrb[0].mxu0
      %v519 = vadd.f32 %v227, %v518
      %v520 = vpop.f32.mrb[0].mxu0
      %v521 = vpop.f32.mrb[0].mxu0
      %v522 = vadd.f32 %v227, %v521
      %v523 = vpop.f32.mrb[0].mxu0
      %524 = vmatprep.mubr.bf16.mxu0 0
      %525 = vmatmul.mubr.bf16.gmra.mrb[0].mxu0 %v307
      %v526 = vpop.f32.mrb[0].mxu0
      %v527 = vadd.f32 %v227, %v526
      %v528 = vpop.f32.mrb[0].mxu0
      %v529 = vpop.f32.mrb[0].mxu0
      %v530 = vadd.f32 %v227, %v529
      %v531 = vpop.f32.mrb[0].mxu0
      %532 = vdwg.mxu0
      %vm533 = vcmp.gt.f32.partialorder %v407, 0.0
      %vm534 = vcmp.gt.f32.partialorder %v410, 0.0
      %vm535 = vcmp.gt.f32.partialorder %v415, 0.0
      %vm536 = vcmp.gt.f32.partialorder %v418, 0.0
      %vm537 = vcmp.gt.f32.partialorder %v423, 0.0
      %vm538 = vcmp.gt.f32.partialorder %v426, 0.0
      %vm539 = vcmp.gt.f32.partialorder %v431, 0.0
      %vm540 = vcmp.gt.f32.partialorder %v434, 0.0
      %vm541 = vcmp.gt.f32.partialorder %v439, 0.0
      %vm542 = vcmp.gt.f32.partialorder %v442, 0.0
      %vm543 = vcmp.gt.f32.partialorder %v447, 0.0
      %vm544 = vcmp.gt.f32.partialorder %v450, 0.0
      %vm545 = vcmp.gt.f32.partialorder %v455, 0.0
      %vm546 = vcmp.gt.f32.partialorder %v458, 0.0
      %vm547 = vcmp.gt.f32.partialorder %v463, 0.0
      %vm548 = vcmp.gt.f32.partialorder %v466, 0.0
      %vm549 = vcmp.gt.f32.partialorder %v471, 0.0
      %vm550 = vcmp.gt.f32.partialorder %v474, 0.0
      %vm551 = vcmp.gt.f32.partialorder %v479, 0.0
      %vm552 = vcmp.gt.f32.partialorder %v482, 0.0
      %vm553 = vcmp.gt.f32.partialorder %v487, 0.0
      %vm554 = vcmp.gt.f32.partialorder %v490, 0.0
      %vm555 = vcmp.gt.f32.partialorder %v495, 0.0
      %vm556 = vcmp.gt.f32.partialorder %v498, 0.0
      %vm557 = vcmp.gt.f32.partialorder %v503, 0.0
      %vm558 = vcmp.gt.f32.partialorder %v506, 0.0
      %vm559 = vcmp.gt.f32.partialorder %v511, 0.0
      %vm560 = vcmp.gt.f32.partialorder %v514, 0.0
      %vm561 = vcmp.gt.f32.partialorder %v519, 0.0
      %vm562 = vcmp.gt.f32.partialorder %v522, 0.0
      %vm563 = vcmp.gt.f32.partialorder %v527, 0.0
      %vm564 = vcmp.gt.f32.partialorder %v530, 0.0
      %v565 = vmul.f32 %v407, 0.2
      %v566 = vmul.f32 %v410, 0.2
      %v567 = vmul.f32 %v415, 0.2
      %v568 = vmul.f32 %v418, 0.2
      %v569 = vmul.f32 %v423, 0.2
      %v570 = vmul.f32 %v426, 0.2
      %v571 = vmul.f32 %v431, 0.2
      %v572 = vmul.f32 %v434, 0.2
      %v573 = vmul.f32 %v439, 0.2
      %v574 = vmul.f32 %v442, 0.2
      %v575 = vmul.f32 %v447, 0.2
      %v576 = vmul.f32 %v450, 0.2
      %v577 = vmul.f32 %v455, 0.2
      %v578 = vmul.f32 %v458, 0.2
      %v579 = vmul.f32 %v463, 0.2
      %v580 = vmul.f32 %v466, 0.2
      %v581 = vmul.f32 %v471, 0.2
      %v582 = vmul.f32 %v474, 0.2
      %v583 = vmul.f32 %v479, 0.2
      %v584 = vmul.f32 %v482, 0.2
      %v585 = vmul.f32 %v487, 0.2
      %v586 = vmul.f32 %v490, 0.2
      %v587 = vmul.f32 %v495, 0.2
      %v588 = vmul.f32 %v498, 0.2
      %v589 = vmul.f32 %v503, 0.2
      %v590 = vmul.f32 %v506, 0.2
      %v591 = vmul.f32 %v511, 0.2
      %v592 = vmul.f32 %v514, 0.2
      %v593 = vmul.f32 %v519, 0.2
      %v594 = vmul.f32 %v522, 0.2
      %v595 = vmul.f32 %v527, 0.2
      %v596 = vmul.f32 %v530, 0.2
      %v597 = vsel %vm533, %v407, %v565
      %v598 = vsel %vm534, %v410, %v566
      %v599 = vsel %vm535, %v415, %v567
      %v600 = vsel %vm536, %v418, %v568
      %v601 = vsel %vm537, %v423, %v569
      %v602 = vsel %vm538, %v426, %v570
      %v603 = vsel %vm539, %v431, %v571
      %v604 = vsel %vm540, %v434, %v572
      %v605 = vsel %vm541, %v439, %v573
      %v606 = vsel %vm542, %v442, %v574
      %v607 = vsel %vm543, %v447, %v575
      %v608 = vsel %vm544, %v450, %v576
      %v609 = vsel %vm545, %v455, %v577
      %v610 = vsel %vm546, %v458, %v578
      %v611 = vsel %vm547, %v463, %v579
      %v612 = vsel %vm548, %v466, %v580
      %v613 = vsel %vm549, %v471, %v581
      %v614 = vsel %vm550, %v474, %v582
      %v615 = vsel %vm551, %v479, %v583
      %v616 = vsel %vm552, %v482, %v584
      %v617 = vsel %vm553, %v487, %v585
      %v618 = vsel %vm554, %v490, %v586
      %v619 = vsel %vm555, %v495, %v587
      %v620 = vsel %vm556, %v498, %v588
      %v621 = vsel %vm557, %v503, %v589
      %v622 = vsel %vm558, %v506, %v590
      %v623 = vsel %vm559, %v511, %v591
      %v624 = vsel %vm560, %v514, %v592
      %v625 = vsel %vm561, %v519, %v593
      %v626 = vsel %vm562, %v522, %v594
      %v627 = vsel %vm563, %v527, %v595
      %v628 = vsel %vm564, %v530, %v596
      %v629 = vpack.c.bf16 %v598, %v597
      %v630 = vpack.c.bf16 %v600, %v599
      %v631 = vpack.c.bf16 %v602, %v601
      %v632 = vpack.c.bf16 %v604, %v603
      %v633 = vpack.c.bf16 %v606, %v605
      %v634 = vpack.c.bf16 %v608, %v607
      %v635 = vpack.c.bf16 %v610, %v609
      %v636 = vpack.c.bf16 %v612, %v611
      %v637 = vpack.c.bf16 %v614, %v613
      %v638 = vpack.c.bf16 %v616, %v615
      %v639 = vpack.c.bf16 %v618, %v617
      %v640 = vpack.c.bf16 %v620, %v619
      %v641 = vpack.c.bf16 %v622, %v621
      %v642 = vpack.c.bf16 %v624, %v623
      %v643 = vpack.c.bf16 %v626, %v625
      %v644 = vpack.c.bf16 %v628, %v627
      %v661 = vunpack.c.l.b16 %v629
      %v662 = vunpack.c.h.b16 %v629
      %v663 = vunpack.c.l.b16 %v630
      %v664 = vunpack.c.h.b16 %v630
      %v665 = vunpack.c.l.b16 %v631
      %v666 = vunpack.c.h.b16 %v631
      %v667 = vunpack.c.l.b16 %v632
      %v668 = vunpack.c.h.b16 %v632
      %v669 = vunpack.c.l.b16 %v633
      %v670 = vunpack.c.h.b16 %v633
      %v671 = vunpack.c.l.b16 %v634
      %v672 = vunpack.c.h.b16 %v634
      %v673 = vunpack.c.l.b16 %v635
      %v674 = vunpack.c.h.b16 %v635
      %v675 = vunpack.c.l.b16 %v636
      %v676 = vunpack.c.h.b16 %v636
      %v677 = vunpack.c.l.b16 %v637
      %v678 = vunpack.c.h.b16 %v637
      %v679 = vunpack.c.l.b16 %v638
      %v680 = vunpack.c.h.b16 %v638
      %v681 = vunpack.c.l.b16 %v639
      %v682 = vunpack.c.h.b16 %v639
      %v683 = vunpack.c.l.b16 %v640
      %v684 = vunpack.c.h.b16 %v640
      %v685 = vunpack.c.l.b16 %v641
      %v686 = vunpack.c.h.b16 %v641
      %v687 = vunpack.c.l.b16 %v642
      %v688 = vunpack.c.h.b16 %v642
      %v689 = vunpack.c.l.b16 %v643
      %v690 = vunpack.c.h.b16 %v643
      %v691 = vunpack.c.l.b16 %v644
      %v692 = vunpack.c.h.b16 %v644
      %v693 = vpack.c.b16 %v661, %v661
      %v694 = vpack.c.b16 %v662, %v662
      %v695 = vpack.c.b16 %v663, %v663
      %v696 = vpack.c.b16 %v664, %v664
      %v697 = vpack.c.b16 %v665, %v665
      %v698 = vpack.c.b16 %v666, %v666
      %v699 = vpack.c.b16 %v667, %v667
      %v700 = vpack.c.b16 %v668, %v668
      %v701 = vpack.c.b16 %v669, %v669
      %v702 = vpack.c.b16 %v670, %v670
      %v703 = vpack.c.b16 %v671, %v671
      %v704 = vpack.c.b16 %v672, %v672
      %v705 = vpack.c.b16 %v673, %v673
      %v706 = vpack.c.b16 %v674, %v674
      %v707 = vpack.c.b16 %v675, %v675
      %v708 = vpack.c.b16 %v676, %v676
      %v709 = vpack.c.b16 %v677, %v677
      %v710 = vpack.c.b16 %v678, %v678
      %v711 = vpack.c.b16 %v679, %v679
      %v712 = vpack.c.b16 %v680, %v680
      %v713 = vpack.c.b16 %v681, %v681
      %v714 = vpack.c.b16 %v682, %v682
      %v715 = vpack.c.b16 %v683, %v683
      %v716 = vpack.c.b16 %v684, %v684
      %v717 = vpack.c.b16 %v685, %v685
      %v718 = vpack.c.b16 %v686, %v686
      %v719 = vpack.c.b16 %v687, %v687
      %v720 = vpack.c.b16 %v688, %v688
      %v721 = vpack.c.b16 %v689, %v689
      %v722 = vpack.c.b16 %v690, %v690
      %v723 = vpack.c.b16 %v691, %v691
      %v724 = vpack.c.b16 %v692, %v692
      %757 = vst [vmem:[%s172] sm:$0xf] %v693
      %758 = vst [vmem:[%s172 + $0x4] sm:$0xf] %v694
      %759 = vst [vmem:[%s172 + $0x8] sm:$0xf] %v695
      %760 = vst [vmem:[%s172 + $0xc] sm:$0xf] %v696
      %761 = vst [vmem:[%s172 + $0x10] sm:$0xf] %v697
      %762 = vst [vmem:[%s172 + $0x14] sm:$0xf] %v698
      %763 = vst [vmem:[%s172 + $0x18] sm:$0xf] %v699
      %764 = vst [vmem:[%s172 + $0x1c] sm:$0xf] %v700
      %765 = vst [vmem:[%s172 + $0x20] sm:$0xf] %v701
      %766 = vst [vmem:[%s172 + $0x24] sm:$0xf] %v702
      %767 = vst [vmem:[%s172 + $0x28] sm:$0xf] %v703
      %768 = vst [vmem:[%s172 + $0x2c] sm:$0xf] %v704
      %769 = vst [vmem:[%s172 + $0x30] sm:$0xf] %v705
      %770 = vst [vmem:[%s172 + $0x34] sm:$0xf] %v706
      %771 = vst [vmem:[%s172 + $0x38] sm:$0xf] %v707
      %772 = vst [vmem:[%s172 + $0x3c] sm:$0xf] %v708
      %773 = vst [vmem:[%s172 + $0x40] sm:$0xf] %v709
      %774 = vst [vmem:[%s172 + $0x44] sm:$0xf] %v710
      %775 = vst [vmem:[%s172 + $0x48] sm:$0xf] %v711
      %776 = vst [vmem:[%s172 + $0x4c] sm:$0xf] %v712
      %777 = vst [vmem:[%s172 + $0x50] sm:$0xf] %v713
      %778 = vst [vmem:[%s172 + $0x54] sm:$0xf] %v714
      %779 = vst [vmem:[%s172 + $0x58] sm:$0xf] %v715
      %780 = vst [vmem:[%s172 + $0x5c] sm:$0xf] %v716
      %781 = vst [vmem:[%s172 + $0x60] sm:$0xf] %v717
      %782 = vst [vmem:[%s172 + $0x64] sm:$0xf] %v718
      %783 = vst [vmem:[%s172 + $0x68] sm:$0xf] %v719
      %784 = vst [vmem:[%s172 + $0x6c] sm:$0xf] %v720
      %785 = vst [vmem:[%s172 + $0x70] sm:$0xf] %v721
      %786 = vst [vmem:[%s172 + $0x74] sm:$0xf] %v722
      %787 = vst [vmem:[%s172 + $0x78] sm:$0xf] %v723
      %788 = vst [vmem:[%s172 + $0x7c] sm:$0xf] %v724
      %s789 = smul.u32 32, %s14
      %p790 = scmp.lt.s32.totalorder %s789, 63
      %s791 = scalar_select %p790, %s789, 63
      %s792 = smul.addr %s791, 4
      %s793 = scalar_lea.vmem %s3, %s792
      // Predicated region
      $region33: #{discriminator_forward.5} parent=31 // pred_check
        %p794 = pneg %p100
      $region34: #{discriminator_forward.5} parent=31 // pred_check_branch
        %796 = sbr.rel (%p794) target = $region36
      $region35: #{discriminator_forward.5} parent=31 // pred_region
        %s797 = smul.u32 32, %s14
      $region36: #{discriminator_forward.5} parent=31 // pred_fallthru
        _
    $region32: #{discriminator_forward.5} parent=5 // pred_fallthru
      _
    %p798 = scmp.le.s32.totalorder 2, %s9
    // Predicated region
    $region37: #{discriminator_forward.5} parent=5 // pred_check
      %p799 = pneg %p798
    $region38: #{discriminator_forward.5} parent=5 // pred_check_branch
      %801 = sbr.rel (%p799) target = $region40
    $region39: #{discriminator_forward.5} parent=5 // pred_region
      %s802 = ssub.s32 %s9, 2
      // Predicated region
      $region41: #{discriminator_forward.5} parent=39 // pred_check
        %p803 = pneg %p106
      $region42: #{discriminator_forward.5} parent=39 // pred_check_branch
        %805 = sbr.rel (%p803) target = $region44
      $region43: #{discriminator_forward.5} parent=39 // pred_region
        %s806 = smul.u32 32, %s15
        %p807 = scmp.lt.s32.totalorder %s806, 63
        %s808 = scalar_select %p807, %s806, 63
        %s809 = smul.addr %s808, 4
        %s810 = scalar_lea.vmem %s3, %s809
      $region44: #{discriminator_forward.5} parent=39 // pred_fallthru
        _
    $region40: #{discriminator_forward.5} parent=5 // pred_fallthru
      _
  $region6: #{discriminator_forward.5} parent=0 // loop_footer
    %s13 = sadd.s32 1, %s9
  $region7: #{discriminator_forward.5} parent=0 // loop_footer_branch
    %8 = sbr.rel target = $region3
  $region8: #{discriminator_forward.5} parent=0 // loop_exit
    _

// kernel: discriminator_forward.6
$region0: #{discriminator_forward.6}
  #allocation0 [shape = 'u32[]', space=smem, size = 0x4, offset = 0x4, fixed_abs, tag = 'smem constant byte address 0x4 - core index']
  #allocation1 [shape = 'u32[144,128]{1,0:T(1,128)}', space=vmem, size = 0x12000, scoped, tag = 'internal scratch']
  %s0 = inlined_call_operand.vmem [shape: bf16[128,128], index: 0, kind: input, shape index: {}]
  %s1 = inlined_call_operand.vmem [shape: bf16[128,128], index: 1, kind: input, shape index: {}]
  %s2 = inlined_call_operand.vmem [shape: f32[3,128], index: 2, kind: input, shape index: {}]
  %s3 = inlined_call_operand.vmem [shape: bf16[128,128], index: 3, kind: output, shape index: {}]
  %s4 = sld [smem:[#allocation0]]
  $region22: #{discriminator_forward.6} parent=0
    _
  %s6 = ssub.s32 1, %s4
  %s7 = scalar_select 0, %s6, %s4
  // Predicated region
  $region2: #{discriminator_forward.6} parent=0 // pred_check
    _
  $region3: #{discriminator_forward.6} parent=0 // pred_check_branch
    %9 = sbr.rel (0) target = $region5
  $region4: #{discriminator_forward.6} parent=0 // pred_region
    _
  $region5: #{discriminator_forward.6} parent=0 // pred_fallthru
    _
  // Predicated region
  $region6: #{discriminator_forward.6} parent=0 // pred_check
    _
  $region7: #{discriminator_forward.6} parent=0 // pred_check_branch
    %11 = sbr.rel (0) target = $region9
  $region8: #{discriminator_forward.6} parent=0 // pred_region
    _
  $region9: #{discriminator_forward.6} parent=0 // pred_fallthru
    _
  // Predicated region
  $region10: #{discriminator_forward.6} parent=0 // pred_check
    _
  $region11: #{discriminator_forward.6} parent=0 // pred_check_branch
    %13 = sbr.rel (0) target = $region13
  $region12: #{discriminator_forward.6} parent=0 // pred_region
    _
  $region13: #{discriminator_forward.6} parent=0 // pred_fallthru
    _
  %v15 = vld [vmem:[%s0] sm:$0xf]
  %v16 = vld [vmem:[%s0 + $0x4] sm:$0xf]
  %v17 = vld [vmem:[%s0 + $0x8] sm:$0xf]
  %v18 = vld [vmem:[%s0 + $0xc] sm:$0xf]
  %v19 = vld [vmem:[%s0 + $0x10] sm:$0xf]
  %v20 = vld [vmem:[%s0 + $0x14] sm:$0xf]
  %v21 = vld [vmem:[%s0 + $0x18] sm:$0xf]
  %v22 = vld [vmem:[%s0 + $0x1c] sm:$0xf]
  %v23 = vld [vmem:[%s0 + $0x20] sm:$0xf]
  %v24 = vld [vmem:[%s0 + $0x24] sm:$0xf]
  %v25 = vld [vmem:[%s0 + $0x28] sm:$0xf]
  %v26 = vld [vmem:[%s0 + $0x2c] sm:$0xf]
  %v27 = vld [vmem:[%s0 + $0x30] sm:$0xf]
  %v28 = vld [vmem:[%s0 + $0x34] sm:$0xf]
  %v29 = vld [vmem:[%s0 + $0x38] sm:$0xf]
  %v30 = vld [vmem:[%s0 + $0x3c] sm:$0xf]
  %v31 = vld [vmem:[%s1] sm:$0xf]
  %v32 = vld [vmem:[%s1 + $0x4] sm:$0xf]
  %v33 = vld [vmem:[%s1 + $0x8] sm:$0xf]
  %v34 = vld [vmem:[%s1 + $0xc] sm:$0xf]
  %v35 = vld [vmem:[%s1 + $0x10] sm:$0xf]
  %v36 = vld [vmem:[%s1 + $0x14] sm:$0xf]
  %v37 = vld [vmem:[%s1 + $0x18] sm:$0xf]
  %v38 = vld [vmem:[%s1 + $0x1c] sm:$0xf]
  %v39 = vld [vmem:[%s1 + $0x20] sm:$0xf]
  %v40 = vld [vmem:[%s1 + $0x24] sm:$0xf]
  %v41 = vld [vmem:[%s1 + $0x28] sm:$0xf]
  %v42 = vld [vmem:[%s1 + $0x2c] sm:$0xf]
  %v43 = vld [vmem:[%s1 + $0x30] sm:$0xf]
  %v44 = vld [vmem:[%s1 + $0x34] sm:$0xf]
  %v45 = vld [vmem:[%s1 + $0x38] sm:$0xf]
  %v46 = vld [vmem:[%s1 + $0x3c] sm:$0xf]
  %v63 = vunpack.c.l.b16 %v15
  %v64 = vunpack.c.l.b16 %v16
  %v65 = vunpack.c.l.b16 %v17
  %v66 = vunpack.c.l.b16 %v18
  %v67 = vunpack.c.l.b16 %v19
  %v68 = vunpack.c.l.b16 %v20
  %v69 = vunpack.c.l.b16 %v21
  %v70 = vunpack.c.l.b16 %v22
  %v71 = vunpack.c.l.b16 %v23
  %v72 = vunpack.c.l.b16 %v24
  %v73 = vunpack.c.l.b16 %v25
  %v74 = vunpack.c.l.b16 %v26
  %v75 = vunpack.c.l.b16 %v27
  %v76 = vunpack.c.l.b16 %v28
  %v77 = vunpack.c.l.b16 %v29
  %v78 = vunpack.c.l.b16 %v30
  %v79 = vpack.c.b16 %v64, %v63
  %v80 = vpack.c.b16 %v66, %v65
  %v81 = vpack.c.b16 %v68, %v67
  %v82 = vpack.c.b16 %v70, %v69
  %v83 = vpack.c.b16 %v72, %v71
  %v84 = vpack.c.b16 %v74, %v73
  %v85 = vpack.c.b16 %v76, %v75
  %v86 = vpack.c.b16 %v78, %v77
  %v111 = vunpack.c.l.b16 %v31
  %v112 = vunpack.c.l.b16 %v32
  %v113 = vunpack.c.l.b16 %v33
  %v114 = vunpack.c.l.b16 %v34
  %v115 = vunpack.c.l.b16 %v35
  %v116 = vunpack.c.l.b16 %v36
  %v117 = vunpack.c.l.b16 %v37
  %v118 = vunpack.c.l.b16 %v38
  %v119 = vunpack.c.l.b16 %v39
  %v120 = vunpack.c.l.b16 %v40
  %v121 = vunpack.c.l.b16 %v41
  %v122 = vunpack.c.l.b16 %v42
  %v123 = vunpack.c.l.b16 %v43
  %v124 = vunpack.c.l.b16 %v44
  %v125 = vunpack.c.l.b16 %v45
  %v126 = vunpack.c.l.b16 %v46
  %v127 = vpack.c.b16 %v112, %v111
  %v128 = vpack.c.b16 %v114, %v113
  %v129 = vpack.c.b16 %v116, %v115
  %v130 = vpack.c.b16 %v118, %v117
  %v131 = vpack.c.b16 %v120, %v119
  %v132 = vpack.c.b16 %v122, %v121
  %v133 = vpack.c.b16 %v124, %v123
  %v134 = vpack.c.b16 %v126, %v125
  %143 = vmatprep.subr.bf16.mxu0 0
  %144 = vmatpush1.bf16.msra.mxu0 %v127
  %145 = vmatprep.subr.bf16.mxu0 0
  %146 = vmatpush1.bf16.msra.mxu0 %v128
  %147 = vmatprep.subr.bf16.mxu0 0
  %148 = vmatpush1.bf16.msra.mxu0 %v129
  %149 = vmatprep.subr.bf16.mxu0 0
  %150 = vmatpush1.bf16.msra.mxu0 %v130
  %151 = vmatprep.subr.bf16.mxu0 0
  %152 = vmatpush1.bf16.msra.mxu0 %v131
  %153 = vmatprep.subr.bf16.mxu0 0
  %154 = vmatpush1.bf16.msra.mxu0 %v132
  %155 = vmatprep.subr.bf16.mxu0 0
  %156 = vmatpush1.bf16.msra.mxu0 %v133
  %157 = vmatprep.subr.bf16.mxu0 0
  %158 = vmatpush1.bf16.msra.mxu0 %v134
  %159 = vmatprep.subr.bf16.mxu0 0
  %160 = vmatpush1.bf16.msra.mxu0 0
  %161 = vmatprep.subr.bf16.mxu0 0
  %162 = vmatpush1.bf16.msra.mxu0 0
  %163 = vmatprep.subr.bf16.mxu0 0
  %164 = vmatpush1.bf16.msra.mxu0 0
  %165 = vmatprep.subr.bf16.mxu0 0
  %166 = vmatpush1.bf16.msra.mxu0 0
  %167 = vmatprep.subr.bf16.mxu0 0
  %168 = vmatpush1.bf16.msra.mxu0 0
  %169 = vmatprep.subr.bf16.mxu0 0
  %170 = vmatpush1.bf16.msra.mxu0 0
  %171 = vmatprep.subr.bf16.mxu0 0
  %172 = vmatpush1.bf16.msra.mxu0 0
  %173 = vmatprep.subr.bf16.mxu0 0
  %174 = vmatpush1.bf16.msra.mxu0 0
  %175 = vmatprep.mubr.bf16.mxu0 0
  %176 = vmatmul.mubr.bf16.gmra.mrb[0].mxu0 %v79
  %v177 = vpop.f32.mrb[0].mxu0
  %v178 = vadd.f32 0.0, %v177
  %v179 = vpop.f32.mrb[0].mxu0
  %v180 = vpop.f32.mrb[0].mxu0
  %v181 = vadd.f32 0.0, %v180
  %v182 = vpop.f32.mrb[0].mxu0
  %183 = vmatprep.mubr.bf16.mxu0 0
  %184 = vmatmul.mubr.bf16.gmra.mrb[0].mxu0 %v80
  %v185 = vpop.f32.mrb[0].mxu0
  %v186 = vadd.f32 0.0, %v185
  %v187 = vpop.f32.mrb[0].mxu0
  %v188 = vpop.f32.mrb[0].mxu0
  %v189 = vadd.f32 0.0, %v188
  %v190 = vpop.f32.mrb[0].mxu0
  %191 = vmatprep.mubr.bf16.mxu0 0
  %192 = vmatmul.mubr.bf16.gmra.mrb[0].mxu0 %v81
  %v193 = vpop.f32.mrb[0].mxu0
  %v194 = vadd.f32 0.0, %v193
  %v195 = vpop.f32.mrb[0].mxu0
  %v196 = vpop.f32.mrb[0].mxu0
  %v197 = vadd.f32 0.0, %v196
  %v198 = vpop.f32.mrb[0].mxu0
  %199 = vmatprep.mubr.bf16.mxu0 0
  %200 = vmatmul.mubr.bf16.gmra.mrb[0].mxu0 %v82
  %v201 = vpop.f32.mrb[0].mxu0
  %v202 = vadd.f32 0.0, %v201
  %v203 = vpop.f32.mrb[0].mxu0
  %v204 = vpop.f32.mrb[0].mxu0
  %v205 = vadd.f32 0.0, %v204
  %v206 = vpop.f32.mrb[0].mxu0
  %207 = vmatprep.mubr.bf16.mxu0 0
  %208 = vmatmul.mubr.bf16.gmra.mrb[0].mxu0 %v83
  %v209 = vpop.f32.mrb[0].mxu0
  %v210 = vadd.f32 0.0, %v209
  %v211 = vpop.f32.mrb[0].mxu0
  %v212 = vpop.f32.mrb[0].mxu0
  %v213 = vadd.f32 0.0, %v212
  %v214 = vpop.f32.mrb[0].mxu0
  %215 = vmatprep.mubr.bf16.mxu0 0
  %216 = vmatmul.mubr.bf16.gmra.mrb[0].mxu0 %v84
  %v217 = vpop.f32.mrb[0].mxu0
  %v218 = vadd.f32 0.0, %v217
  %v219 = vpop.f32.mrb[0].mxu0
  %v220 = vpop.f32.mrb[0].mxu0
  %v221 = vadd.f32 0.0, %v220
  %v222 = vpop.f32.mrb[0].mxu0
  %223 = vmatprep.mubr.bf16.mxu0 0
  %224 = vmatmul.mubr.bf16.gmra.mrb[0].mxu0 %v85
  %v225 = vpop.f32.mrb[0].mxu0
  %v226 = vadd.f32 0.0, %v225
  %v227 = vpop.f32.mrb[0].mxu0
  %v228 = vpop.f32.mrb[0].mxu0
  %v229 = vadd.f32 0.0, %v228
  %v230 = vpop.f32.mrb[0].mxu0
  %231 = vmatprep.mubr.bf16.mxu0 0
  %232 = vmatmul.mubr.bf16.gmra.mrb[0].mxu0 %v86
  %v233 = vpop.f32.mrb[0].mxu0
  %v234 = vadd.f32 0.0, %v233
  %v235 = vpop.f32.mrb[0].mxu0
  %v236 = vpop.f32.mrb[0].mxu0
  %v237 = vadd.f32 0.0, %v236
  %v238 = vpop.f32.mrb[0].mxu0
  %239 = vdwg.mxu0
  %v240 = vld [vmem:[%s2] sm:$0x7]
  %v241 = vadd.f32 %v178, %v181
  %v242 = vadd.f32 %v241, %v186
  %v243 = vadd.f32 %v242, %v189
  %v244 = vadd.f32 %v243, %v194
  %v245 = vadd.f32 %v244, %v197
  %v246 = vadd.f32 %v245, %v202
  %v247 = vadd.f32 %v246, %v205
  %v248 = vadd.f32 %v247, %v210
  %v249 = vadd.f32 %v248, %v213
  %v250 = vadd.f32 %v249, %v218
  %v251 = vadd.f32 %v250, %v221
  %v252 = vadd.f32 %v251, %v226
  %v253 = vadd.f32 %v252, %v229
  %v254 = vadd.f32 %v253, %v234
  %v255 = vadd.f32 %v254, %v237
  %v256 = vrot.slane %v255, 4
  %v257 = vadd.f32 %v255, %v256
  %v258 = vrot.slane %v257, 2
  %v259 = vadd.f32 %v257, %v258
  %v260 = vrot.slane %v259, 1
  %v261 = vadd.f32 %v259, %v260
  %v262 = vmul.f32 %v261, 0.0078125
  %v263 = vsub.f32 %v178, %v262
  %v264 = vsub.f32 %v181, %v262
  %v265 = vsub.f32 %v186, %v262
  %v266 = vsub.f32 %v189, %v262
  %v267 = vsub.f32 %v194, %v262
  %v268 = vsub.f32 %v197, %v262
  %v269 = vsub.f32 %v202, %v262
  %v270 = vsub.f32 %v205, %v262
  %v271 = vsub.f32 %v210, %v262
  %v272 = vsub.f32 %v213, %v262
  %v273 = vsub.f32 %v218, %v262
  %v274 = vsub.f32 %v221, %v262
  %v275 = vsub.f32 %v226, %v262
  %v276 = vsub.f32 %v229, %v262
  %v277 = vsub.f32 %v234, %v262
  %v278 = vsub.f32 %v237, %v262
  %v279 = vmul.f32 %v263, %v263
  %v280 = vmul.f32 %v264, %v264
  %v281 = vmul.f32 %v265, %v265
  %v282 = vmul.f32 %v266, %v266
  %v283 = vmul.f32 %v267, %v267
  %v284 = vmul.f32 %v268, %v268
  %v285 = vmul.f32 %v269, %v269
  %v286 = vmul.f32 %v270, %v270
  %v287 = vmul.f32 %v271, %v271
  %v288 = vmul.f32 %v272, %v272
  %v289 = vmul.f32 %v273, %v273
  %v290 = vmul.f32 %v274, %v274
  %v291 = vmul.f32 %v275, %v275
  %v292 = vmul.f32 %v276, %v276
  %v293 = vmul.f32 %v277, %v277
  %v294 = vmul.f32 %v278, %v278
  %v295 = vadd.f32 %v279, %v280
  %v296 = vadd.f32 %v295, %v281
  %v297 = vadd.f32 %v296, %v282
  %v298 = vadd.f32 %v297, %v283
  %v299 = vadd.f32 %v298, %v284
  %v300 = vadd.f32 %v299, %v285
  %v301 = vadd.f32 %v300, %v286
  %v302 = vadd.f32 %v301, %v287
  %v303 = vadd.f32 %v302, %v288
  %v304 = vadd.f32 %v303, %v289
  %v305 = vadd.f32 %v304, %v290
  %v306 = vadd.f32 %v305, %v291
  %v307 = vadd.f32 %v306, %v292
  %v308 = vadd.f32 %v307, %v293
  %v309 = vadd.f32 %v308, %v294
  %v310 = vrot.slane %v309, 4
  %v311 = vadd.f32 %v309, %v310
  %v312 = vrot.slane %v311, 2
  %v313 = vadd.f32 %v311, %v312
  %v314 = vrot.slane %v313, 1
  %v315 = vadd.f32 %v313, %v314
  %v316 = vmul.f32 %v315, 0.0078125
  %v317 = vadd.f32 %v316, 1e-05
  %v318 = vrsqrt.pop %v317
  %v319 = vmul.f32 %v240, %v318
  %v320 = vlaneseq
  %v321 = vshrl.u32 %v320, 7
  %v322 = vsub.s32 1, %v321
  %v323 = vrot.slane %v319, %v322
  %v324 = vmul.f32 %v263, %v323
  %v325 = vmul.f32 %v264, %v323
  %v326 = vmul.f32 %v265, %v323
  %v327 = vmul.f32 %v266, %v323
  %v328 = vmul.f32 %v267, %v323
  %v329 = vmul.f32 %v268, %v323
  %v330 = vmul.f32 %v269, %v323
  %v331 = vmul.f32 %v270, %v323
  %v332 = vmul.f32 %v271, %v323
  %v333 = vmul.f32 %v272, %v323
  %v334 = vmul.f32 %v273, %v323
  %v335 = vmul.f32 %v274, %v323
  %v336 = vmul.f32 %v275, %v323
  %v337 = vmul.f32 %v276, %v323
  %v338 = vmul.f32 %v277, %v323
  %v339 = vmul.f32 %v278, %v323
  %v340 = vlaneseq
  %v341 = vshrl.u32 %v340, 7
  %v342 = vsub.s32 2, %v341
  %v343 = vrot.slane %v240, %v342
  %v344 = vadd.f32 %v324, %v343
  %v345 = vadd.f32 %v325, %v343
  %v346 = vadd.f32 %v326, %v343
  %v347 = vadd.f32 %v327, %v343
  %v348 = vadd.f32 %v328, %v343
  %v349 = vadd.f32 %v329, %v343
  %v350 = vadd.f32 %v330, %v343
  %v351 = vadd.f32 %v331, %v343
  %v352 = vadd.f32 %v332, %v343
  %v353 = vadd.f32 %v333, %v343
  %v354 = vadd.f32 %v334, %v343
  %v355 = vadd.f32 %v335, %v343
  %v356 = vadd.f32 %v336, %v343
  %v357 = vadd.f32 %v337, %v343
  %v358 = vadd.f32 %v338, %v343
  %v359 = vadd.f32 %v339, %v343
  %vm360 = vcmp.gt.f32.partialorder %v344, 0.0
  %vm361 = vcmp.gt.f32.partialorder %v345, 0.0
  %vm362 = vcmp.gt.f32.partialorder %v346, 0.0
  %vm363 = vcmp.gt.f32.partialorder %v347, 0.0
  %vm364 = vcmp.gt.f32.partialorder %v348, 0.0
  %vm365 = vcmp.gt.f32.partialorder %v349, 0.0
  %vm366 = vcmp.gt.f32.partialorder %v350, 0.0
  %vm367 = vcmp.gt.f32.partialorder %v351, 0.0
  %vm368 = vcmp.gt.f32.partialorder %v352, 0.0
  %vm369 = vcmp.gt.f32.partialorder %v353, 0.0
  %vm370 = vcmp.gt.f32.partialorder %v354, 0.0
  %vm371 = vcmp.gt.f32.partialorder %v355, 0.0
  %vm372 = vcmp.gt.f32.partialorder %v356, 0.0
  %vm373 = vcmp.gt.f32.partialorder %v357, 0.0
  %vm374 = vcmp.gt.f32.partialorder %v358, 0.0
  %vm375 = vcmp.gt.f32.partialorder %v359, 0.0
  %v376 = vmul.f32 %v344, 0.2
  %v377 = vmul.f32 %v345, 0.2
  %v378 = vmul.f32 %v346, 0.2
  %v379 = vmul.f32 %v347, 0.2
  %v380 = vmul.f32 %v348, 0.2
  %v381 = vmul.f32 %v349, 0.2
  %v382 = vmul.f32 %v350, 0.2
  %v383 = vmul.f32 %v351, 0.2
  %v384 = vmul.f32 %v352, 0.2
  %v385 = vmul.f32 %v353, 0.2
  %v386 = vmul.f32 %v354, 0.2
  %v387 = vmul.f32 %v355, 0.2
  %v388 = vmul.f32 %v356, 0.2
  %v389 = vmul.f32 %v357, 0.2
  %v390 = vmul.f32 %v358, 0.2
  %v391 = vmul.f32 %v359, 0.2
  %v392 = vsel %vm360, %v344, %v376
  %v393 = vsel %vm361, %v345, %v377
  %v394 = vsel %vm362, %v346, %v378
  %v395 = vsel %vm363, %v347, %v379
  %v396 = vsel %vm364, %v348, %v380
  %v397 = vsel %vm365, %v349, %v381
  %v398 = vsel %vm366, %v350, %v382
  %v399 = vsel %vm367, %v351, %v383
  %v400 = vsel %vm368, %v352, %v384
  %v401 = vsel %vm369, %v353, %v385
  %v402 = vsel %vm370, %v354, %v386
  %v403 = vsel %vm371, %v355, %v387
  %v404 = vsel %vm372, %v356, %v388
  %v405 = vsel %vm373, %v357, %v389
  %v406 = vsel %vm374, %v358, %v390
  %v407 = vsel %vm375, %v359, %v391
  %v408 = vpack.c.bf16 %v393, %v392
  %v409 = vpack.c.bf16 %v395, %v394
  %v410 = vpack.c.bf16 %v397, %v396
  %v411 = vpack.c.bf16 %v399, %v398
  %v412 = vpack.c.bf16 %v401, %v400
  %v413 = vpack.c.bf16 %v403, %v402
  %v414 = vpack.c.bf16 %v405, %v404
  %v415 = vpack.c.bf16 %v407, %v406
  %v424 = vunpack.c.l.b16 %v408
  %v425 = vunpack.c.h.b16 %v408
  %v426 = vunpack.c.l.b16 %v409
  %v427 = vunpack.c.h.b16 %v409
  %v428 = vunpack.c.l.b16 %v410
  %v429 = vunpack.c.h.b16 %v410
  %v430 = vunpack.c.l.b16 %v411
  %v431 = vunpack.c.h.b16 %v411
  %v432 = vunpack.c.l.b16 %v412
  %v433 = vunpack.c.h.b16 %v412
  %v434 = vunpack.c.l.b16 %v413
  %v435 = vunpack.c.h.b16 %v413
  %v436 = vunpack.c.l.b16 %v414
  %v437 = vunpack.c.h.b16 %v414
  %v438 = vunpack.c.l.b16 %v415
  %v439 = vunpack.c.h.b16 %v415
  %v440 = vpack.c.b16 %v424, %v424
  %v441 = vpack.c.b16 %v425, %v425
  %v442 = vpack.c.b16 %v426, %v426
  %v443 = vpack.c.b16 %v427, %v427
  %v444 = vpack.c.b16 %v428, %v428
  %v445 = vpack.c.b16 %v429, %v429
  %v446 = vpack.c.b16 %v430, %v430
  %v447 = vpack.c.b16 %v431, %v431
  %v448 = vpack.c.b16 %v432, %v432
  %v449 = vpack.c.b16 %v433, %v433
  %v450 = vpack.c.b16 %v434, %v434
  %v451 = vpack.c.b16 %v435, %v435
  %v452 = vpack.c.b16 %v436, %v436
  %v453 = vpack.c.b16 %v437, %v437
  %v454 = vpack.c.b16 %v438, %v438
  %v455 = vpack.c.b16 %v439, %v439
  %472 = vst [vmem:[%s3] sm:$0xf] %v440
  %473 = vst [vmem:[%s3 + $0x4] sm:$0xf] %v441
  %474 = vst [vmem:[%s3 + $0x8] sm:$0xf] %v442
  %475 = vst [vmem:[%s3 + $0xc] sm:$0xf] %v443
  %476 = vst [vmem:[%s3 + $0x10] sm:$0xf] %v444
  %477 = vst [vmem:[%s3 + $0x14] sm:$0xf] %v445
  %478 = vst [vmem:[%s3 + $0x18] sm:$0xf] %v446
  %479 = vst [vmem:[%s3 + $0x1c] sm:$0xf] %v447
  %480 = vst [vmem:[%s3 + $0x20] sm:$0xf] %v448
  %481 = vst [vmem:[%s3 + $0x24] sm:$0xf] %v449
  %482 = vst [vmem:[%s3 + $0x28] sm:$0xf] %v450
  %483 = vst [vmem:[%s3 + $0x2c] sm:$0xf] %v451
  %484 = vst [vmem:[%s3 + $0x30] sm:$0xf] %v452
  %485 = vst [vmem:[%s3 + $0x34] sm:$0xf] %v453
  %486 = vst [vmem:[%s3 + $0x38] sm:$0xf] %v454
  %487 = vst [vmem:[%s3 + $0x3c] sm:$0xf] %v455
  // Predicated region
  $region14: #{discriminator_forward.6} parent=0 // pred_check
    _
  $region15: #{discriminator_forward.6} parent=0 // pred_check_branch
    %489 = sbr.rel (0) target = $region17
  $region16: #{discriminator_forward.6} parent=0 // pred_region
    _
  $region17: #{discriminator_forward.6} parent=0 // pred_fallthru
    _
  // Predicated region
  $region18: #{discriminator_forward.6} parent=0 // pred_check
    _
  $region19: #{discriminator_forward.6} parent=0 // pred_check_branch
    %491 = sbr.rel (0) target = $region21
  $region20: #{discriminator_forward.6} parent=0 // pred_region
    _
  $region21: #{discriminator_forward.6} parent=0 // pred_fallthru
    _

// kernel: discriminator_forward.7
$region0: #{discriminator_forward.7}
  #allocation0 [shape = 'u32[]', space=smem, size = 0x4, offset = 0x4, fixed_abs, tag = 'smem constant byte address 0x4 - core index']
  #allocation1 [shape = 'u32[144,128]{1,0:T(1,128)}', space=vmem, size = 0x12000, scoped, tag = 'internal scratch']
  %s0 = inlined_call_operand.vmem [shape: bf16[32,256], index: 0, kind: input, shape index: {}]
  %s1 = inlined_call_operand.vmem [shape: bf16[256,128], index: 1, kind: input, shape index: {}]
  %s2 = inlined_call_operand.vmem [shape: f32[3,128], index: 2, kind: input, shape index: {}]
  %s3 = inlined_call_operand.vmem [shape: bf16[32,128], index: 3, kind: output, shape index: {}]
  %s4 = sld [smem:[#allocation0]]
  $region22: #{discriminator_forward.7} parent=0
    _
  %s6 = ssub.s32 1, %s4
  %s7 = scalar_select 0, %s6, %s4
  // Predicated region
  $region2: #{discriminator_forward.7} parent=0 // pred_check
    _
  $region3: #{discriminator_forward.7} parent=0 // pred_check_branch
    %9 = sbr.rel (0) target = $region5
  $region4: #{discriminator_forward.7} parent=0 // pred_region
    _
  $region5: #{discriminator_forward.7} parent=0 // pred_fallthru
    _
  // Predicated region
  $region6: #{discriminator_forward.7} parent=0 // pred_check
    _
  $region7: #{discriminator_forward.7} parent=0 // pred_check_branch
    %11 = sbr.rel (0) target = $region9
  $region8: #{discriminator_forward.7} parent=0 // pred_region
    _
  $region9: #{discriminator_forward.7} parent=0 // pred_fallthru
    _
  // Predicated region
  $region10: #{discriminator_forward.7} parent=0 // pred_check
    _
  $region11: #{discriminator_forward.7} parent=0 // pred_check_branch
    %13 = sbr.rel (0) target = $region13
  $region12: #{discriminator_forward.7} parent=0 // pred_region
    _
  $region13: #{discriminator_forward.7} parent=0 // pred_fallthru
    _
  %v15 = vld [vmem:[%s0] sm:$0xff]
  %v16 = vld [vmem:[%s0 + $0x8] sm:$0xff]
  %v17 = vld [vmem:[%s0 + $0x10] sm:$0xff]
  %v18 = vld [vmem:[%s0 + $0x18] sm:$0xff]
  %v19 = vld [vmem:[%s1] sm:$0xf]
  %v20 = vld [vmem:[%s1 + $0x4] sm:$0xf]
  %v21 = vld [vmem:[%s1 + $0x8] sm:$0xf]
  %v22 = vld [vmem:[%s1 + $0xc] sm:$0xf]
  %v23 = vld [vmem:[%s1 + $0x10] sm:$0xf]
  %v24 = vld [vmem:[%s1 + $0x14] sm:$0xf]
  %v25 = vld [vmem:[%s1 + $0x18] sm:$0xf]
  %v26 = vld [vmem:[%s1 + $0x1c] sm:$0xf]
  %v27 = vld [vmem:[%s1 + $0x20] sm:$0xf]
  %v28 = vld [vmem:[%s1 + $0x24] sm:$0xf]
  %v29 = vld [vmem:[%s1 + $0x28] sm:$0xf]
  %v30 = vld [vmem:[%s1 + $0x2c] sm:$0xf]
  %v31 = vld [vmem:[%s1 + $0x30] sm:$0xf]
  %v32 = vld [vmem:[%s1 + $0x34] sm:$0xf]
  %v33 = vld [vmem:[%s1 + $0x38] sm:$0xf]
  %v34 = vld [vmem:[%s1 + $0x3c] sm:$0xf]
  %v35 = vld [vmem:[%s1 + $0x40] sm:$0xf]
  %v36 = vld [vmem:[%s1 + $0x44] sm:$0xf]
  %v37 = vld [vmem:[%s1 + $0x48] sm:$0xf]
  %v38 = vld [vmem:[%s1 + $0x4c] sm:$0xf]
  %v39 = vld [vmem:[%s1 + $0x50] sm:$0xf]
  %v40 = vld [vmem:[%s1 + $0x54] sm:$0xf]
  %v41 = vld [vmem:[%s1 + $0x58] sm:$0xf]
  %v42 = vld [vmem:[%s1 + $0x5c] sm:$0xf]
  %v43 = vld [vmem:[%s1 + $0x60] sm:$0xf]
  %v44 = vld [vmem:[%s1 + $0x64] sm:$0xf]
  %v45 = vld [vmem:[%s1 + $0x68] sm:$0xf]
  %v46 = vld [vmem:[%s1 + $0x6c] sm:$0xf]
  %v47 = vld [vmem:[%s1 + $0x70] sm:$0xf]
  %v48 = vld [vmem:[%s1 + $0x74] sm:$0xf]
  %v49 = vld [vmem:[%s1 + $0x78] sm:$0xf]
  %v50 = vld [vmem:[%s1 + $0x7c] sm:$0xf]
  %v55 = vunpack.c.l.b16 %v15
  %v56 = vunpack.c.h.b16 %v15
  %v57 = vunpack.c.l.b16 %v16
  %v58 = vunpack.c.h.b16 %v16
  %v59 = vunpack.c.l.b16 %v17
  %v60 = vunpack.c.h.b16 %v17
  %v61 = vunpack.c.l.b16 %v18
  %v62 = vunpack.c.h.b16 %v18
  %v63 = vpack.c.b16 %v57, %v55
  %v64 = vpack.c.b16 %v58, %v56
  %v65 = vpack.c.b16 %v61, %v59
  %v66 = vpack.c.b16 %v62, %v60
  %v103 = vunpack.c.l.b16 %v19
  %v104 = vunpack.c.l.b16 %v20
  %v105 = vunpack.c.l.b16 %v21
  %v106 = vunpack.c.l.b16 %v22
  %v107 = vunpack.c.l.b16 %v23
  %v108 = vunpack.c.l.b16 %v24
  %v109 = vunpack.c.l.b16 %v25
  %v110 = vunpack.c.l.b16 %v26
  %v111 = vunpack.c.l.b16 %v27
  %v112 = vunpack.c.l.b16 %v28
  %v113 = vunpack.c.l.b16 %v29
  %v114 = vunpack.c.l.b16 %v30
  %v115 = vunpack.c.l.b16 %v31
  %v116 = vunpack.c.l.b16 %v32
  %v117 = vunpack.c.l.b16 %v33
  %v118 = vunpack.c.l.b16 %v34
  %v119 = vunpack.c.l.b16 %v35
  %v120 = vunpack.c.l.b16 %v36
  %v121 = vunpack.c.l.b16 %v37
  %v122 = vunpack.c.l.b16 %v38
  %v123 = vunpack.c.l.b16 %v39
  %v124 = vunpack.c.l.b16 %v40
  %v125 = vunpack.c.l.b16 %v41
  %v126 = vunpack.c.l.b16 %v42
  %v127 = vunpack.c.l.b16 %v43
  %v128 = vunpack.c.l.b16 %v44
  %v129 = vunpack.c.l.b16 %v45
  %v130 = vunpack.c.l.b16 %v46
  %v131 = vunpack.c.l.b16 %v47
  %v132 = vunpack.c.l.b16 %v48
  %v133 = vunpack.c.l.b16 %v49
  %v134 = vunpack.c.l.b16 %v50
  %v135 = vpack.c.b16 %v104, %v103
  %v136 = vpack.c.b16 %v106, %v105
  %v137 = vpack.c.b16 %v108, %v107
  %v138 = vpack.c.b16 %v110, %v109
  %v139 = vpack.c.b16 %v112, %v111
  %v140 = vpack.c.b16 %v114, %v113
  %v141 = vpack.c.b16 %v116, %v115
  %v142 = vpack.c.b16 %v118, %v117
  %v143 = vpack.c.b16 %v120, %v119
  %v144 = vpack.c.b16 %v122, %v121
  %v145 = vpack.c.b16 %v124, %v123
  %v146 = vpack.c.b16 %v126, %v125
  %v147 = vpack.c.b16 %v128, %v127
  %v148 = vpack.c.b16 %v130, %v129
  %v149 = vpack.c.b16 %v132, %v131
  %v150 = vpack.c.b16 %v134, %v133
  %167 = vmatprep.subr.bf16.mxu0 0
  %168 = vmatpush1.bf16.msra.mxu0 %v135
  %169 = vmatprep.subr.bf16.mxu0 0
  %170 = vmatpush1.bf16.msra.mxu0 %v136
  %171 = vmatprep.subr.bf16.mxu0 0
  %172 = vmatpush1.bf16.msra.mxu0 %v137
  %173 = vmatprep.subr.bf16.mxu0 0
  %174 = vmatpush1.bf16.msra.mxu0 %v138
  %175 = vmatprep.subr.bf16.mxu0 0
  %176 = vmatpush1.bf16.msra.mxu0 %v139
  %177 = vmatprep.subr.bf16.mxu0 0
  %178 = vmatpush1.bf16.msra.mxu0 %v140
  %179 = vmatprep.subr.bf16.mxu0 0
  %180 = vmatpush1.bf16.msra.mxu0 %v141
  %181 = vmatprep.subr.bf16.mxu0 0
  %182 = vmatpush1.bf16.msra.mxu0 %v142
  %183 = vmatprep.subr.bf16.mxu0 0
  %184 = vmatpush1.bf16.msra.mxu0 %v143
  %185 = vmatprep.subr.bf16.mxu0 0
  %186 = vmatpush1.bf16.msra.mxu0 %v144
  %187 = vmatprep.subr.bf16.mxu0 0
  %188 = vmatpush1.bf16.msra.mxu0 %v145
  %189 = vmatprep.subr.bf16.mxu0 0
  %190 = vmatpush1.bf16.msra.mxu0 %v146
  %191 = vmatprep.subr.bf16.mxu0 0
  %192 = vmatpush1.bf16.msra.mxu0 %v147
  %193 = vmatprep.subr.bf16.mxu0 0
  %194 = vmatpush1.bf16.msra.mxu0 %v148
  %195 = vmatprep.subr.bf16.mxu0 0
  %196 = vmatpush1.bf16.msra.mxu0 %v149
  %197 = vmatprep.subr.bf16.mxu0 0
  %198 = vmatpush1.bf16.msra.mxu0 %v150
  %199 = vmatprep.mubr.bf16.mxu0 %v64
  %200 = vmatmul.mubr.bf16.gmra.mrb[0].mxu0 %v63
  %v201 = vpop.f32.mrb[0].mxu0
  %v202 = vadd.f32 0.0, %v201
  %v203 = vpop.f32.mrb[0].mxu0
  %v204 = vpop.f32.mrb[0].mxu0
  %v205 = vadd.f32 0.0, %v204
  %v206 = vpop.f32.mrb[0].mxu0
  %207 = vmatprep.mubr.bf16.mxu0 %v66
  %208 = vmatmul.mubr.bf16.gmra.mrb[0].mxu0 %v65
  %v209 = vpop.f32.mrb[0].mxu0
  %v210 = vadd.f32 0.0, %v209
  %v211 = vpop.f32.mrb[0].mxu0
  %v212 = vpop.f32.mrb[0].mxu0
  %v213 = vadd.f32 0.0, %v212
  %v214 = vpop.f32.mrb[0].mxu0
  %215 = vdwg.mxu0
  %v216 = vld [vmem:[%s2] sm:$0x7]
  %v217 = vadd.f32 %v202, %v205
  %v218 = vadd.f32 %v217, %v210
  %v219 = vadd.f32 %v218, %v213
  %v220 = vrot.slane %v219, 4
  %v221 = vadd.f32 %v219, %v220
  %v222 = vrot.slane %v221, 2
  %v223 = vadd.f32 %v221, %v222
  %v224 = vrot.slane %v223, 1
  %v225 = vadd.f32 %v223, %v224
  %v226 = vmul.f32 %v225, 0.03125
  %v227 = vsub.f32 %v202, %v226
  %v228 = vsub.f32 %v205, %v226
  %v229 = vsub.f32 %v210, %v226
  %v230 = vsub.f32 %v213, %v226
  %v231 = vmul.f32 %v227, %v227
  %v232 = vmul.f32 %v228, %v228
  %v233 = vmul.f32 %v229, %v229
  %v234 = vmul.f32 %v230, %v230
  %v235 = vadd.f32 %v231, %v232
  %v236 = vadd.f32 %v235, %v233
  %v237 = vadd.f32 %v236, %v234
  %v238 = vrot.slane %v237, 4
  %v239 = vadd.f32 %v237, %v238
  %v240 = vrot.slane %v239, 2
  %v241 = vadd.f32 %v239, %v240
  %v242 = vrot.slane %v241, 1
  %v243 = vadd.f32 %v241, %v242
  %v244 = vmul.f32 %v243, 0.03125
  %v245 = vadd.f32 %v244, 1e-05
  %v246 = vrsqrt.pop %v245
  %v247 = vmul.f32 %v216, %v246
  %v248 = vlaneseq
  %v249 = vshrl.u32 %v248, 7
  %v250 = vsub.s32 1, %v249
  %v251 = vrot.slane %v247, %v250
  %v252 = vmul.f32 %v227, %v251
  %v253 = vmul.f32 %v228, %v251
  %v254 = vmul.f32 %v229, %v251
  %v255 = vmul.f32 %v230, %v251
  %v256 = vlaneseq
  %v257 = vshrl.u32 %v256, 7
  %v258 = vsub.s32 2, %v257
  %v259 = vrot.slane %v216, %v258
  %v260 = vadd.f32 %v252, %v259
  %v261 = vadd.f32 %v253, %v259
  %v262 = vadd.f32 %v254, %v259
  %v263 = vadd.f32 %v255, %v259
  %vm264 = vcmp.gt.f32.partialorder %v260, 0.0
  %vm265 = vcmp.gt.f32.partialorder %v261, 0.0
  %vm266 = vcmp.gt.f32.partialorder %v262, 0.0
  %vm267 = vcmp.gt.f32.partialorder %v263, 0.0
  %v268 = vmul.f32 %v260, 0.2
  %v269 = vmul.f32 %v261, 0.2
  %v270 = vmul.f32 %v262, 0.2
  %v271 = vmul.f32 %v263, 0.2
  %v272 = vsel %vm264, %v260, %v268
  %v273 = vsel %vm265, %v261, %v269
  %v274 = vsel %vm266, %v262, %v270
  %v275 = vsel %vm267, %v263, %v271
  %v276 = vpack.c.bf16 %v273, %v272
  %v277 = vpack.c.bf16 %v275, %v274
  %v280 = vunpack.c.l.b16 %v276
  %v281 = vunpack.c.h.b16 %v276
  %v282 = vunpack.c.l.b16 %v277
  %v283 = vunpack.c.h.b16 %v277
  %v284 = vpack.c.b16 %v280, %v280
  %v285 = vpack.c.b16 %v281, %v281
  %v286 = vpack.c.b16 %v282, %v282
  %v287 = vpack.c.b16 %v283, %v283
  %292 = vst [vmem:[%s3] sm:$0xf] %v284
  %293 = vst [vmem:[%s3 + $0x4] sm:$0xf] %v285
  %294 = vst [vmem:[%s3 + $0x8] sm:$0xf] %v286
  %295 = vst [vmem:[%s3 + $0xc] sm:$0xf] %v287
  // Predicated region
  $region14: #{discriminator_forward.7} parent=0 // pred_check
    _
  $region15: #{discriminator_forward.7} parent=0 // pred_check_branch
    %297 = sbr.rel (0) target = $region17
  $region16: #{discriminator_forward.7} parent=0 // pred_region
    _
  $region17: #{discriminator_forward.7} parent=0 // pred_fallthru
    _
  // Predicated region
  $region18: #{discriminator_forward.7} parent=0 // pred_check
    _
  $region19: #{discriminator_forward.7} parent=0 // pred_check_branch
    %299 = sbr.rel (0) target = $region21
  $region20: #{discriminator_forward.7} parent=0 // pred_region
    _
  $region21: #{discriminator_forward.7} parent=0 // pred_fallthru
    _

// kernel: discriminator_forward.8
$region0: #{discriminator_forward.8}
  #allocation0 [shape = 'u32[]', space=smem, size = 0x4, offset = 0x4, fixed_abs, tag = 'smem constant byte address 0x4 - core index']
  #allocation1 [shape = 'u32[144,128]{1,0:T(1,128)}', space=vmem, size = 0x12000, scoped, tag = 'internal scratch']
  %s0 = inlined_call_operand.vmem [shape: bf16[8,512], index: 0, kind: input, shape index: {}]
  %s1 = inlined_call_operand.vmem [shape: bf16[512,128], index: 1, kind: input, shape index: {}]
  %s2 = inlined_call_operand.vmem [shape: f32[3,128], index: 2, kind: input, shape index: {}]
  %s3 = inlined_call_operand.vmem [shape: bf16[8,128], index: 3, kind: output, shape index: {}]
  %s4 = sld [smem:[#allocation0]]
  $region22: #{discriminator_forward.8} parent=0
    _
  %s6 = ssub.s32 1, %s4
  %s7 = scalar_select 0, %s6, %s4
  // Predicated region
  $region2: #{discriminator_forward.8} parent=0 // pred_check
    _
  $region3: #{discriminator_forward.8} parent=0 // pred_check_branch
    %9 = sbr.rel (0) target = $region5
  $region4: #{discriminator_forward.8} parent=0 // pred_region
    _
  $region5: #{discriminator_forward.8} parent=0 // pred_fallthru
    _
  // Predicated region
  $region6: #{discriminator_forward.8} parent=0 // pred_check
    _
  $region7: #{discriminator_forward.8} parent=0 // pred_check_branch
    %11 = sbr.rel (0) target = $region9
  $region8: #{discriminator_forward.8} parent=0 // pred_region
    _
  $region9: #{discriminator_forward.8} parent=0 // pred_fallthru
    _
  // Predicated region
  $region10: #{discriminator_forward.8} parent=0 // pred_check
    _
  $region11: #{discriminator_forward.8} parent=0 // pred_check_branch
    %13 = sbr.rel (0) target = $region13
  $region12: #{discriminator_forward.8} parent=0 // pred_region
    _
  $region13: #{discriminator_forward.8} parent=0 // pred_fallthru
    _
  %v15 = vld [vmem:[%s0] sm:$0xff]
  %v16 = vld [vmem:[%s0 + $0x8] sm:$0xff]
  %v17 = vld [vmem:[%s1] sm:$0xf]
  %v18 = vld [vmem:[%s1 + $0x4] sm:$0xf]
  %v19 = vld [vmem:[%s1 + $0x8] sm:$0xf]
  %v20 = vld [vmem:[%s1 + $0xc] sm:$0xf]
  %v21 = vld [vmem:[%s1 + $0x10] sm:$0xf]
  %v22 = vld [vmem:[%s1 + $0x14] sm:$0xf]
  %v23 = vld [vmem:[%s1 + $0x18] sm:$0xf]
  %v24 = vld [vmem:[%s1 + $0x1c] sm:$0xf]
  %v25 = vld [vmem:[%s1 + $0x20] sm:$0xf]
  %v26 = vld [vmem:[%s1 + $0x24] sm:$0xf]
  %v27 = vld [vmem:[%s1 + $0x28] sm:$0xf]
  %v28 = vld [vmem:[%s1 + $0x2c] sm:$0xf]
  %v29 = vld [vmem:[%s1 + $0x30] sm:$0xf]
  %v30 = vld [vmem:[%s1 + $0x34] sm:$0xf]
  %v31 = vld [vmem:[%s1 + $0x38] sm:$0xf]
  %v32 = vld [vmem:[%s1 + $0x3c] sm:$0xf]
  %v33 = vld [vmem:[%s1 + $0x40] sm:$0xf]
  %v34 = vld [vmem:[%s1 + $0x44] sm:$0xf]
  %v35 = vld [vmem:[%s1 + $0x48] sm:$0xf]
  %v36 = vld [vmem:[%s1 + $0x4c] sm:$0xf]
  %v37 = vld [vmem:[%s1 + $0x50] sm:$0xf]
  %v38 = vld [vmem:[%s1 + $0x54] sm:$0xf]
  %v39 = vld [vmem:[%s1 + $0x58] sm:$0xf]
  %v40 = vld [vmem:[%s1 + $0x5c] sm:$0xf]
  %v41 = vld [vmem:[%s1 + $0x60] sm:$0xf]
  %v42 = vld [vmem:[%s1 + $0x64] sm:$0xf]
  %v43 = vld [vmem:[%s1 + $0x68] sm:$0xf]
  %v44 = vld [vmem:[%s1 + $0x6c] sm:$0xf]
  %v45 = vld [vmem:[%s1 + $0x70] sm:$0xf]
  %v46 = vld [vmem:[%s1 + $0x74] sm:$0xf]
  %v47 = vld [vmem:[%s1 + $0x78] sm:$0xf]
  %v48 = vld [vmem:[%s1 + $0x7c] sm:$0xf]
  %v49 = vld [vmem:[%s1 + $0x80] sm:$0xf]
  %v50 = vld [vmem:[%s1 + $0x84] sm:$0xf]
  %v51 = vld [vmem:[%s1 + $0x88] sm:$0xf]
  %v52 = vld [vmem:[%s1 + $0x8c] sm:$0xf]
  %v53 = vld [vmem:[%s1 + $0x90] sm:$0xf]
  %v54 = vld [vmem:[%s1 + $0x94] sm:$0xf]
  %v55 = vld [vmem:[%s1 + $0x98] sm:$0xf]
  %v56 = vld [vmem:[%s1 + $0x9c] sm:$0xf]
  %v57 = vld [vmem:[%s1 + $0xa0] sm:$0xf]
  %v58 = vld [vmem:[%s1 + $0xa4] sm:$0xf]
  %v59 = vld [vmem:[%s1 + $0xa8] sm:$0xf]
  %v60 = vld [vmem:[%s1 + $0xac] sm:$0xf]
  %v61 = vld [vmem:[%s1 + $0xb0] sm:$0xf]
  %v62 = vld [vmem:[%s1 + $0xb4] sm:$0xf]
  %v63 = vld [vmem:[%s1 + $0xb8] sm:$0xf]
  %v64 = vld [vmem:[%s1 + $0xbc] sm:$0xf]
  %v65 = vld [vmem:[%s1 + $0xc0] sm:$0xf]
  %v66 = vld [vmem:[%s1 + $0xc4] sm:$0xf]
  %v67 = vld [vmem:[%s1 + $0xc8] sm:$0xf]
  %v68 = vld [vmem:[%s1 + $0xcc] sm:$0xf]
  %v69 = vld [vmem:[%s1 + $0xd0] sm:$0xf]
  %v70 = vld [vmem:[%s1 + $0xd4] sm:$0xf]
  %v71 = vld [vmem:[%s1 + $0xd8] sm:$0xf]
  %v72 = vld [vmem:[%s1 + $0xdc] sm:$0xf]
  %v73 = vld [vmem:[%s1 + $0xe0] sm:$0xf]
  %v74 = vld [vmem:[%s1 + $0xe4] sm:$0xf]
  %v75 = vld [vmem:[%s1 + $0xe8] sm:$0xf]
  %v76 = vld [vmem:[%s1 + $0xec] sm:$0xf]
  %v77 = vld [vmem:[%s1 + $0xf0] sm:$0xf]
  %v78 = vld [vmem:[%s1 + $0xf4] sm:$0xf]
  %v79 = vld [vmem:[%s1 + $0xf8] sm:$0xf]
  %v80 = vld [vmem:[%s1 + $0xfc] sm:$0xf]
  %v83 = vunpack.c.l.b16 %v15
  %v84 = vunpack.c.h.b16 %v15
  %v85 = vunpack.c.l.b16 %v16
  %v86 = vunpack.c.h.b16 %v16
  %v87 = vpack.c.b16 %v83, %v83
  %v88 = vpack.c.b16 %v84, %v84
  %v89 = vpack.c.b16 %v85, %v85
  %v90 = vpack.c.b16 %v86, %v86
  %v159 = vunpack.c.l.b16 %v17
  %v160 = vunpack.c.l.b16 %v18
  %v161 = vunpack.c.l.b16 %v19
  %v162 = vunpack.c.l.b16 %v20
  %v163 = vunpack.c.l.b16 %v21
  %v164 = vunpack.c.l.b16 %v22
  %v165 = vunpack.c.l.b16 %v23
  %v166 = vunpack.c.l.b16 %v24
  %v167 = vunpack.c.l.b16 %v25
  %v168 = vunpack.c.l.b16 %v26
  %v169 = vunpack.c.l.b16 %v27
  %v170 = vunpack.c.l.b16 %v28
  %v171 = vunpack.c.l.b16 %v29
  %v172 = vunpack.c.l.b16 %v30
  %v173 = vunpack.c.l.b16 %v31
  %v174 = vunpack.c.l.b16 %v32
  %v175 = vunpack.c.l.b16 %v33
  %v176 = vunpack.c.l.b16 %v34
  %v177 = vunpack.c.l.b16 %v35
  %v178 = vunpack.c.l.b16 %v36
  %v179 = vunpack.c.l.b16 %v37
  %v180 = vunpack.c.l.b16 %v38
  %v181 = vunpack.c.l.b16 %v39
  %v182 = vunpack.c.l.b16 %v40
  %v183 = vunpack.c.l.b16 %v41
  %v184 = vunpack.c.l.b16 %v42
  %v185 = vunpack.c.l.b16 %v43
  %v186 = vunpack.c.l.b16 %v44
  %v187 = vunpack.c.l.b16 %v45
  %v188 = vunpack.c.l.b16 %v46
  %v189 = vunpack.c.l.b16 %v47
  %v190 = vunpack.c.l.b16 %v48
  %v191 = vunpack.c.l.b16 %v49
  %v192 = vunpack.c.l.b16 %v50
  %v193 = vunpack.c.l.b16 %v51
  %v194 = vunpack.c.l.b16 %v52
  %v195 = vunpack.c.l.b16 %v53
  %v196 = vunpack.c.l.b16 %v54
  %v197 = vunpack.c.l.b16 %v55
  %v198 = vunpack.c.l.b16 %v56
  %v199 = vunpack.c.l.b16 %v57
  %v200 = vunpack.c.l.b16 %v58
  %v201 = vunpack.c.l.b16 %v59
  %v202 = vunpack.c.l.b16 %v60
  %v203 = vunpack.c.l.b16 %v61
  %v204 = vunpack.c.l.b16 %v62
  %v205 = vunpack.c.l.b16 %v63
  %v206 = vunpack.c.l.b16 %v64
  %v207 = vunpack.c.l.b16 %v65
  %v208 = vunpack.c.l.b16 %v66
  %v209 = vunpack.c.l.b16 %v67
  %v210 = vunpack.c.l.b16 %v68
  %v211 = vunpack.c.l.b16 %v69
  %v212 = vunpack.c.l.b16 %v70
  %v213 = vunpack.c.l.b16 %v71
  %v214 = vunpack.c.l.b16 %v72
  %v215 = vunpack.c.l.b16 %v73
  %v216 = vunpack.c.l.b16 %v74
  %v217 = vunpack.c.l.b16 %v75
  %v218 = vunpack.c.l.b16 %v76
  %v219 = vunpack.c.l.b16 %v77
  %v220 = vunpack.c.l.b16 %v78
  %v221 = vunpack.c.l.b16 %v79
  %v222 = vunpack.c.l.b16 %v80
  %v223 = vpack.c.b16 %v160, %v159
  %v224 = vpack.c.b16 %v162, %v161
  %v225 = vpack.c.b16 %v164, %v163
  %v226 = vpack.c.b16 %v166, %v165
  %v227 = vpack.c.b16 %v168, %v167
  %v228 = vpack.c.b16 %v170, %v169
  %v229 = vpack.c.b16 %v172, %v171
  %v230 = vpack.c.b16 %v174, %v173
  %v231 = vpack.c.b16 %v176, %v175
  %v232 = vpack.c.b16 %v178, %v177
  %v233 = vpack.c.b16 %v180, %v179
  %v234 = vpack.c.b16 %v182, %v181
  %v235 = vpack.c.b16 %v184, %v183
  %v236 = vpack.c.b16 %v186, %v185
  %v237 = vpack.c.b16 %v188, %v187
  %v238 = vpack.c.b16 %v190, %v189
  %v239 = vpack.c.b16 %v192, %v191
  %v240 = vpack.c.b16 %v194, %v193
  %v241 = vpack.c.b16 %v196, %v195
  %v242 = vpack.c.b16 %v198, %v197
  %v243 = vpack.c.b16 %v200, %v199
  %v244 = vpack.c.b16 %v202, %v201
  %v245 = vpack.c.b16 %v204, %v203
  %v246 = vpack.c.b16 %v206, %v205
  %v247 = vpack.c.b16 %v208, %v207
  %v248 = vpack.c.b16 %v210, %v209
  %v249 = vpack.c.b16 %v212, %v211
  %v250 = vpack.c.b16 %v214, %v213
  %v251 = vpack.c.b16 %v216, %v215
  %v252 = vpack.c.b16 %v218, %v217
  %v253 = vpack.c.b16 %v220, %v219
  %v254 = vpack.c.b16 %v222, %v221
  %287 = vmatprep.subr.bf16.mxu0 0
  %288 = vmatpush1.bf16.msra.mxu0 %v223
  %289 = vmatprep.subr.bf16.mxu0 0
  %290 = vmatpush1.bf16.msra.mxu0 %v224
  %291 = vmatprep.subr.bf16.mxu0 0
  %292 = vmatpush1.bf16.msra.mxu0 %v225
  %293 = vmatprep.subr.bf16.mxu0 0
  %294 = vmatpush1.bf16.msra.mxu0 %v226
  %295 = vmatprep.subr.bf16.mxu0 0
  %296 = vmatpush1.bf16.msra.mxu0 %v227
  %297 = vmatprep.subr.bf16.mxu0 0
  %298 = vmatpush1.bf16.msra.mxu0 %v228
  %299 = vmatprep.subr.bf16.mxu0 0
  %300 = vmatpush1.bf16.msra.mxu0 %v229
  %301 = vmatprep.subr.bf16.mxu0 0
  %302 = vmatpush1.bf16.msra.mxu0 %v230
  %303 = vmatprep.subr.bf16.mxu0 0
  %304 = vmatpush1.bf16.msra.mxu0 %v231
  %305 = vmatprep.subr.bf16.mxu0 0
  %306 = vmatpush1.bf16.msra.mxu0 %v232
  %307 = vmatprep.subr.bf16.mxu0 0
  %308 = vmatpush1.bf16.msra.mxu0 %v233
  %309 = vmatprep.subr.bf16.mxu0 0
  %310 = vmatpush1.bf16.msra.mxu0 %v234
  %311 = vmatprep.subr.bf16.mxu0 0
  %312 = vmatpush1.bf16.msra.mxu0 %v235
  %313 = vmatprep.subr.bf16.mxu0 0
  %314 = vmatpush1.bf16.msra.mxu0 %v236
  %315 = vmatprep.subr.bf16.mxu0 0
  %316 = vmatpush1.bf16.msra.mxu0 %v237
  %317 = vmatprep.subr.bf16.mxu0 0
  %318 = vmatpush1.bf16.msra.mxu0 %v238
  %319 = vmatprep.mubr.bf16.mxu0 %v88
  %320 = vmatmul.mubr.bf16.gmra.mrb[0].mxu0 %v87
  %v321 = vpop.f32.mrb[0].mxu0
  %v322 = vadd.f32 0.0, %v321
  %v323 = vpop.f32.mrb[0].mxu0
  %v324 = vpop.f32.mrb[0].mxu0
  %v325 = vpop.f32.mrb[0].mxu0
  %326 = vdwg.mxu0
  %327 = vmatprep.subr.bf16.mxu0 0
  %328 = vmatpush1.bf16.msra.mxu0 %v239
  %329 = vmatprep.subr.bf16.mxu0 0
  %330 = vmatpush1.bf16.msra.mxu0 %v240
  %331 = vmatprep.subr.bf16.mxu0 0
  %332 = vmatpush1.bf16.msra.mxu0 %v241
  %333 = vmatprep.subr.bf16.mxu0 0
  %334 = vmatpush1.bf16.msra.mxu0 %v242
  %335 = vmatprep.subr.bf16.mxu0 0
  %336 = vmatpush1.bf16.msra.mxu0 %v243
  %337 = vmatprep.subr.bf16.mxu0 0
  %338 = vmatpush1.bf16.msra.mxu0 %v244
  %339 = vmatprep.subr.bf16.mxu0 0
  %340 = vmatpush1.bf16.msra.mxu0 %v245
  %341 = vmatprep.subr.bf16.mxu0 0
  %342 = vmatpush1.bf16.msra.mxu0 %v246
  %343 = vmatprep.subr.bf16.mxu0 0
  %344 = vmatpush1.bf16.msra.mxu0 %v247
  %345 = vmatprep.subr.bf16.mxu0 0
  %346 = vmatpush1.bf16.msra.mxu0 %v248
  %347 = vmatprep.subr.bf16.mxu0 0
  %348 = vmatpush1.bf16.msra.mxu0 %v249
  %349 = vmatprep.subr.bf16.mxu0 0
  %350 = vmatpush1.bf16.msra.mxu0 %v250
  %351 = vmatprep.subr.bf16.mxu0 0
  %352 = vmatpush1.bf16.msra.mxu0 %v251
  %353 = vmatprep.subr.bf16.mxu0 0
  %354 = vmatpush1.bf16.msra.mxu0 %v252
  %355 = vmatprep.subr.bf16.mxu0 0
  %356 = vmatpush1.bf16.msra.mxu0 %v253
  %357 = vmatprep.subr.bf16.mxu0 0
  %358 = vmatpush1.bf16.msra.mxu0 %v254
  %359 = vmatprep.mubr.bf16.mxu0 %v90
  %360 = vmatmul.mubr.bf16.gmra.mrb[0].mxu0 %v89
  %v361 = vpop.f32.mrb[0].mxu0
  %v362 = vadd.f32 %v322, %v361
  %v363 = vpop.f32.mrb[0].mxu0
  %v364 = vpop.f32.mrb[0].mxu0
  %v365 = vpop.f32.mrb[0].mxu0
  %366 = vdwg.mxu0
  %v367 = vld [vmem:[%s2] sm:$0x7]
  %v368 = vrot.slane %v362, 4
  %v369 = vadd.f32 %v362, %v368
  %v370 = vrot.slane %v369, 2
  %v371 = vadd.f32 %v369, %v370
  %v372 = vrot.slane %v371, 1
  %v373 = vadd.f32 %v371, %v372
  %v374 = vmul.f32 %v373, 0.125
  %v375 = vsub.f32 %v362, %v374
  %v376 = vmul.f32 %v375, %v375
  %v377 = vrot.slane %v376, 4
  %v378 = vadd.f32 %v376, %v377
  %v379 = vrot.slane %v378, 2
  %v380 = vadd.f32 %v378, %v379
  %v381 = vrot.slane %v380, 1
  %v382 = vadd.f32 %v380, %v381
  %v383 = vmul.f32 %v382, 0.125
  %v384 = vadd.f32 %v383, 1e-05
  %v385 = vrsqrt.pop %v384
  %v386 = vmul.f32 %v367, %v385
  %v387 = vlaneseq
  %v388 = vshrl.u32 %v387, 7
  %v389 = vsub.s32 1, %v388
  %v390 = vrot.slane %v386, %v389
  %v391 = vmul.f32 %v375, %v390
  %v392 = vlaneseq
  %v393 = vshrl.u32 %v392, 7
  %v394 = vsub.s32 2, %v393
  %v395 = vrot.slane %v367, %v394
  %v396 = vadd.f32 %v391, %v395
  %vm397 = vcmp.gt.f32.partialorder %v396, 0.0
  %v398 = vmul.f32 %v396, 0.2
  %v399 = vsel %vm397, %v396, %v398
  %v400 = vpack.c.bf16 %v399, %v399
  %401 = vst [vmem:[%s3] sm:$0xf] %v400
  // Predicated region
  $region14: #{discriminator_forward.8} parent=0 // pred_check
    _
  $region15: #{discriminator_forward.8} parent=0 // pred_check_branch
    %403 = sbr.rel (0) target = $region17
  $region16: #{discriminator_forward.8} parent=0 // pred_region
    _
  $region17: #{discriminator_forward.8} parent=0 // pred_fallthru
    _
  // Predicated region
  $region18: #{discriminator_forward.8} parent=0 // pred_check
    _
  $region19: #{discriminator_forward.8} parent=0 // pred_check_branch
    %405 = sbr.rel (0) target = $region21
  $region20: #{discriminator_forward.8} parent=0 // pred_region
    _
  $region21: #{discriminator_forward.8} parent=0 // pred_fallthru
    _

// kernel: discriminator_forward.9
$region0: #{discriminator_forward.9}
  #allocation0 [shape = 'u32[]', space=smem, size = 0x4, offset = 0x4, fixed_abs, tag = 'smem constant byte address 0x4 - core index']
  #allocation1 [shape = 'u32[144,128]{1,0:T(1,128)}', space=vmem, size = 0x12000, scoped, tag = 'internal scratch']
  %s0 = inlined_call_operand.vmem [shape: bf16[8,1024], index: 0, kind: input, shape index: {}]
  %s1 = inlined_call_operand.vmem [shape: bf16[1024,128], index: 1, kind: input, shape index: {}]
  %s2 = inlined_call_operand.vmem [shape: f32[3,128], index: 2, kind: input, shape index: {}]
  %s3 = inlined_call_operand.vmem [shape: f32[8,128], index: 3, kind: output, shape index: {}]
  %s4 = sld [smem:[#allocation0]]
  $region22: #{discriminator_forward.9} parent=0
    _
  %s6 = ssub.s32 1, %s4
  %s7 = scalar_select 0, %s6, %s4
  // Predicated region
  $region2: #{discriminator_forward.9} parent=0 // pred_check
    _
  $region3: #{discriminator_forward.9} parent=0 // pred_check_branch
    %9 = sbr.rel (0) target = $region5
  $region4: #{discriminator_forward.9} parent=0 // pred_region
    _
  $region5: #{discriminator_forward.9} parent=0 // pred_fallthru
    _
  // Predicated region
  $region6: #{discriminator_forward.9} parent=0 // pred_check
    _
  $region7: #{discriminator_forward.9} parent=0 // pred_check_branch
    %11 = sbr.rel (0) target = $region9
  $region8: #{discriminator_forward.9} parent=0 // pred_region
    _
  $region9: #{discriminator_forward.9} parent=0 // pred_fallthru
    _
  // Predicated region
  $region10: #{discriminator_forward.9} parent=0 // pred_check
    _
  $region11: #{discriminator_forward.9} parent=0 // pred_check_branch
    %13 = sbr.rel (0) target = $region13
  $region12: #{discriminator_forward.9} parent=0 // pred_region
    _
  $region13: #{discriminator_forward.9} parent=0 // pred_fallthru
    _
  %v15 = vld [vmem:[%s0] sm:$0xff]
  %v16 = vld [vmem:[%s0 + $0x8] sm:$0xff]
  %v17 = vld [vmem:[%s0 + $0x10] sm:$0xff]
  %v18 = vld [vmem:[%s0 + $0x18] sm:$0xff]
  %v19 = vld [vmem:[%s1] sm:$0xf]
  %v20 = vld [vmem:[%s1 + $0x4] sm:$0xf]
  %v21 = vld [vmem:[%s1 + $0x8] sm:$0xf]
  %v22 = vld [vmem:[%s1 + $0xc] sm:$0xf]
  %v23 = vld [vmem:[%s1 + $0x10] sm:$0xf]
  %v24 = vld [vmem:[%s1 + $0x14] sm:$0xf]
  %v25 = vld [vmem:[%s1 + $0x18] sm:$0xf]
  %v26 = vld [vmem:[%s1 + $0x1c] sm:$0xf]
  %v27 = vld [vmem:[%s1 + $0x20] sm:$0xf]
  %v28 = vld [vmem:[%s1 + $0x24] sm:$0xf]
  %v29 = vld [vmem:[%s1 + $0x28] sm:$0xf]
  %v30 = vld [vmem:[%s1 + $0x2c] sm:$0xf]
  %v31 = vld [vmem:[%s1 + $0x30] sm:$0xf]
  %v32 = vld [vmem:[%s1 + $0x34] sm:$0xf]
  %v33 = vld [vmem:[%s1 + $0x38] sm:$0xf]
  %v34 = vld [vmem:[%s1 + $0x3c] sm:$0xf]
  %v35 = vld [vmem:[%s1 + $0x40] sm:$0xf]
  %v36 = vld [vmem:[%s1 + $0x44] sm:$0xf]
  %v37 = vld [vmem:[%s1 + $0x48] sm:$0xf]
  %v38 = vld [vmem:[%s1 + $0x4c] sm:$0xf]
  %v39 = vld [vmem:[%s1 + $0x50] sm:$0xf]
  %v40 = vld [vmem:[%s1 + $0x54] sm:$0xf]
  %v41 = vld [vmem:[%s1 + $0x58] sm:$0xf]
  %v42 = vld [vmem:[%s1 + $0x5c] sm:$0xf]
  %v43 = vld [vmem:[%s1 + $0x60] sm:$0xf]
  %v44 = vld [vmem:[%s1 + $0x64] sm:$0xf]
  %v45 = vld [vmem:[%s1 + $0x68] sm:$0xf]
  %v46 = vld [vmem:[%s1 + $0x6c] sm:$0xf]
  %v47 = vld [vmem:[%s1 + $0x70] sm:$0xf]
  %v48 = vld [vmem:[%s1 + $0x74] sm:$0xf]
  %v49 = vld [vmem:[%s1 + $0x78] sm:$0xf]
  %v50 = vld [vmem:[%s1 + $0x7c] sm:$0xf]
  %v51 = vld [vmem:[%s1 + $0x80] sm:$0xf]
  %v52 = vld [vmem:[%s1 + $0x84] sm:$0xf]
  %v53 = vld [vmem:[%s1 + $0x88] sm:$0xf]
  %v54 = vld [vmem:[%s1 + $0x8c] sm:$0xf]
  %v55 = vld [vmem:[%s1 + $0x90] sm:$0xf]
  %v56 = vld [vmem:[%s1 + $0x94] sm:$0xf]
  %v57 = vld [vmem:[%s1 + $0x98] sm:$0xf]
  %v58 = vld [vmem:[%s1 + $0x9c] sm:$0xf]
  %v59 = vld [vmem:[%s1 + $0xa0] sm:$0xf]
  %v60 = vld [vmem:[%s1 + $0xa4] sm:$0xf]
  %v61 = vld [vmem:[%s1 + $0xa8] sm:$0xf]
  %v62 = vld [vmem:[%s1 + $0xac] sm:$0xf]
  %v63 = vld [vmem:[%s1 + $0xb0] sm:$0xf]
  %v64 = vld [vmem:[%s1 + $0xb4] sm:$0xf]
  %v65 = vld [vmem:[%s1 + $0xb8] sm:$0xf]
  %v66 = vld [vmem:[%s1 + $0xbc] sm:$0xf]
  %v67 = vld [vmem:[%s1 + $0xc0] sm:$0xf]
  %v68 = vld [vmem:[%s1 + $0xc4] sm:$0xf]
  %v69 = vld [vmem:[%s1 + $0xc8] sm:$0xf]
  %v70 = vld [vmem:[%s1 + $0xcc] sm:$0xf]
  %v71 = vld [vmem:[%s1 + $0xd0] sm:$0xf]
  %v72 = vld [vmem:[%s1 + $0xd4] sm:$0xf]
  %v73 = vld [vmem:[%s1 + $0xd8] sm:$0xf]
  %v74 = vld [vmem:[%s1 + $0xdc] sm:$0xf]
  %v75 = vld [vmem:[%s1 + $0xe0] sm:$0xf]
  %v76 = vld [vmem:[%s1 + $0xe4] sm:$0xf]
  %v77 = vld [vmem:[%s1 + $0xe8] sm:$0xf]
  %v78 = vld [vmem:[%s1 + $0xec] sm:$0xf]
  %v79 = vld [vmem:[%s1 + $0xf0] sm:$0xf]
  %v80 = vld [vmem:[%s1 + $0xf4] sm:$0xf]
  %v81 = vld [vmem:[%s1 + $0xf8] sm:$0xf]
  %v82 = vld [vmem:[%s1 + $0xfc] sm:$0xf]
  %v83 = vld [vmem:[%s1 + $0x100] sm:$0xf]
  %v84 = vld [vmem:[%s1 + $0x104] sm:$0xf]
  %v85 = vld [vmem:[%s1 + $0x108] sm:$0xf]
  %v86 = vld [vmem:[%s1 + $0x10c] sm:$0xf]
  %v87 = vld [vmem:[%s1 + $0x110] sm:$0xf]
  %v88 = vld [vmem:[%s1 + $0x114] sm:$0xf]
  %v89 = vld [vmem:[%s1 + $0x118] sm:$0xf]
  %v90 = vld [vmem:[%s1 + $0x11c] sm:$0xf]
  %v91 = vld [vmem:[%s1 + $0x120] sm:$0xf]
  %v92 = vld [vmem:[%s1 + $0x124] sm:$0xf]
  %v93 = vld [vmem:[%s1 + $0x128] sm:$0xf]
  %v94 = vld [vmem:[%s1 + $0x12c] sm:$0xf]
  %v95 = vld [vmem:[%s1 + $0x130] sm:$0xf]
  %v96 = vld [vmem:[%s1 + $0x134] sm:$0xf]
  %v97 = vld [vmem:[%s1 + $0x138] sm:$0xf]
  %v98 = vld [vmem:[%s1 + $0x13c] sm:$0xf]
  %v99 = vld [vmem:[%s1 + $0x140] sm:$0xf]
  %v100 = vld [vmem:[%s1 + $0x144] sm:$0xf]
  %v101 = vld [vmem:[%s1 + $0x148] sm:$0xf]
  %v102 = vld [vmem:[%s1 + $0x14c] sm:$0xf]
  %v103 = vld [vmem:[%s1 + $0x150] sm:$0xf]
  %v104 = vld [vmem:[%s1 + $0x154] sm:$0xf]
  %v105 = vld [vmem:[%s1 + $0x158] sm:$0xf]
  %v106 = vld [vmem:[%s1 + $0x15c] sm:$0xf]
  %v107 = vld [vmem:[%s1 + $0x160] sm:$0xf]
  %v108 = vld [vmem:[%s1 + $0x164] sm:$0xf]
  %v109 = vld [vmem:[%s1 + $0x168] sm:$0xf]
  %v110 = vld [vmem:[%s1 + $0x16c] sm:$0xf]
  %v111 = vld [vmem:[%s1 + $0x170] sm:$0xf]
  %v112 = vld [vmem:[%s1 + $0x174] sm:$0xf]
  %v113 = vld [vmem:[%s1 + $0x178] sm:$0xf]
  %v114 = vld [vmem:[%s1 + $0x17c] sm:$0xf]
  %v115 = vld [vmem:[%s1 + $0x180] sm:$0xf]
  %v116 = vld [vmem:[%s1 + $0x184] sm:$0xf]
  %v117 = vld [vmem:[%s1 + $0x188] sm:$0xf]
  %v118 = vld [vmem:[%s1 + $0x18c] sm:$0xf]
  %v119 = vld [vmem:[%s1 + $0x190] sm:$0xf]
  %v120 = vld [vmem:[%s1 + $0x194] sm:$0xf]
  %v121 = vld [vmem:[%s1 + $0x198] sm:$0xf]
  %v122 = vld [vmem:[%s1 + $0x19c] sm:$0xf]
  %v123 = vld [vmem:[%s1 + $0x1a0] sm:$0xf]
  %v124 = vld [vmem:[%s1 + $0x1a4] sm:$0xf]
  %v125 = vld [vmem:[%s1 + $0x1a8] sm:$0xf]
  %v126 = vld [vmem:[%s1 + $0x1ac] sm:$0xf]
  %v127 = vld [vmem:[%s1 + $0x1b0] sm:$0xf]
  %v128 = vld [vmem:[%s1 + $0x1b4] sm:$0xf]
  %v129 = vld [vmem:[%s1 + $0x1b8] sm:$0xf]
  %v130 = vld [vmem:[%s1 + $0x1bc] sm:$0xf]
  %v131 = vld [vmem:[%s1 + $0x1c0] sm:$0xf]
  %v132 = vld [vmem:[%s1 + $0x1c4] sm:$0xf]
  %v133 = vld [vmem:[%s1 + $0x1c8] sm:$0xf]
  %v134 = vld [vmem:[%s1 + $0x1cc] sm:$0xf]
  %v135 = vld [vmem:[%s1 + $0x1d0] sm:$0xf]
  %v136 = vld [vmem:[%s1 + $0x1d4] sm:$0xf]
  %v137 = vld [vmem:[%s1 + $0x1d8] sm:$0xf]
  %v138 = vld [vmem:[%s1 + $0x1dc] sm:$0xf]
  %v139 = vld [vmem:[%s1 + $0x1e0] sm:$0xf]
  %v140 = vld [vmem:[%s1 + $0x1e4] sm:$0xf]
  %v141 = vld [vmem:[%s1 + $0x1e8] sm:$0xf]
  %v142 = vld [vmem:[%s1 + $0x1ec] sm:$0xf]
  %v143 = vld [vmem:[%s1 + $0x1f0] sm:$0xf]
  %v144 = vld [vmem:[%s1 + $0x1f4] sm:$0xf]
  %v145 = vld [vmem:[%s1 + $0x1f8] sm:$0xf]
  %v146 = vld [vmem:[%s1 + $0x1fc] sm:$0xf]
  %v147 = vld [vmem:[%s2] sm:$0x7]
  %v148 = vlaneseq
  %v149 = vshrl.u32 %v148, 7
  %v150 = vsub.s32 0, %v149
  %v151 = vrot.slane %v147, %v150
  %v156 = vunpack.c.l.b16 %v15
  %v157 = vunpack.c.h.b16 %v15
  %v158 = vunpack.c.l.b16 %v16
  %v159 = vunpack.c.h.b16 %v16
  %v160 = vunpack.c.l.b16 %v17
  %v161 = vunpack.c.h.b16 %v17
  %v162 = vunpack.c.l.b16 %v18
  %v163 = vunpack.c.h.b16 %v18
  %v164 = vpack.c.b16 %v156, %v156
  %v165 = vpack.c.b16 %v157, %v157
  %v166 = vpack.c.b16 %v158, %v158
  %v167 = vpack.c.b16 %v159, %v159
  %v168 = vpack.c.b16 %v160, %v160
  %v169 = vpack.c.b16 %v161, %v161
  %v170 = vpack.c.b16 %v162, %v162
  %v171 = vpack.c.b16 %v163, %v163
  %v308 = vunpack.c.l.b16 %v19
  %v309 = vunpack.c.l.b16 %v20
  %v310 = vunpack.c.l.b16 %v21
  %v311 = vunpack.c.l.b16 %v22
  %v312 = vunpack.c.l.b16 %v23
  %v313 = vunpack.c.l.b16 %v24
  %v314 = vunpack.c.l.b16 %v25
  %v315 = vunpack.c.l.b16 %v26
  %v316 = vunpack.c.l.b16 %v27
  %v317 = vunpack.c.l.b16 %v28
  %v318 = vunpack.c.l.b16 %v29
  %v319 = vunpack.c.l.b16 %v30
  %v320 = vunpack.c.l.b16 %v31
  %v321 = vunpack.c.l.b16 %v32
  %v322 = vunpack.c.l.b16 %v33
  %v323 = vunpack.c.l.b16 %v34
  %v324 = vunpack.c.l.b16 %v35
  %v325 = vunpack.c.l.b16 %v36
  %v326 = vunpack.c.l.b16 %v37
  %v327 = vunpack.c.l.b16 %v38
  %v328 = vunpack.c.l.b16 %v39
  %v329 = vunpack.c.l.b16 %v40
  %v330 = vunpack.c.l.b16 %v41
  %v331 = vunpack.c.l.b16 %v42
  %v332 = vunpack.c.l.b16 %v43
  %v333 = vunpack.c.l.b16 %v44
  %v334 = vunpack.c.l.b16 %v45
  %v335 = vunpack.c.l.b16 %v46
  %v336 = vunpack.c.l.b16 %v47
  %v337 = vunpack.c.l.b16 %v48
  %v338 = vunpack.c.l.b16 %v49
  %v339 = vunpack.c.l.b16 %v50
  %v340 = vunpack.c.l.b16 %v51
  %v341 = vunpack.c.l.b16 %v52
  %v342 = vunpack.c.l.b16 %v53
  %v343 = vunpack.c.l.b16 %v54
  %v344 = vunpack.c.l.b16 %v55
  %v345 = vunpack.c.l.b16 %v56
  %v346 = vunpack.c.l.b16 %v57
  %v347 = vunpack.c.l.b16 %v58
  %v348 = vunpack.c.l.b16 %v59
  %v349 = vunpack.c.l.b16 %v60
  %v350 = vunpack.c.l.b16 %v61
  %v351 = vunpack.c.l.b16 %v62
  %v352 = vunpack.c.l.b16 %v63
  %v353 = vunpack.c.l.b16 %v64
  %v354 = vunpack.c.l.b16 %v65
  %v355 = vunpack.c.l.b16 %v66
  %v356 = vunpack.c.l.b16 %v67
  %v357 = vunpack.c.l.b16 %v68
  %v358 = vunpack.c.l.b16 %v69
  %v359 = vunpack.c.l.b16 %v70
  %v360 = vunpack.c.l.b16 %v71
  %v361 = vunpack.c.l.b16 %v72
  %v362 = vunpack.c.l.b16 %v73
  %v363 = vunpack.c.l.b16 %v74
  %v364 = vunpack.c.l.b16 %v75
  %v365 = vunpack.c.l.b16 %v76
  %v366 = vunpack.c.l.b16 %v77
  %v367 = vunpack.c.l.b16 %v78
  %v368 = vunpack.c.l.b16 %v79
  %v369 = vunpack.c.l.b16 %v80
  %v370 = vunpack.c.l.b16 %v81
  %v371 = vunpack.c.l.b16 %v82
  %v372 = vunpack.c.l.b16 %v83
  %v373 = vunpack.c.l.b16 %v84
  %v374 = vunpack.c.l.b16 %v85
  %v375 = vunpack.c.l.b16 %v86
  %v376 = vunpack.c.l.b16 %v87
  %v377 = vunpack.c.l.b16 %v88
  %v378 = vunpack.c.l.b16 %v89
  %v379 = vunpack.c.l.b16 %v90
  %v380 = vunpack.c.l.b16 %v91
  %v381 = vunpack.c.l.b16 %v92
  %v382 = vunpack.c.l.b16 %v93
  %v383 = vunpack.c.l.b16 %v94
  %v384 = vunpack.c.l.b16 %v95
  %v385 = vunpack.c.l.b16 %v96
  %v386 = vunpack.c.l.b16 %v97
  %v387 = vunpack.c.l.b16 %v98
  %v388 = vunpack.c.l.b16 %v99
  %v389 = vunpack.c.l.b16 %v100
  %v390 = vunpack.c.l.b16 %v101
  %v391 = vunpack.c.l.b16 %v102
  %v392 = vunpack.c.l.b16 %v103
  %v393 = vunpack.c.l.b16 %v104
  %v394 = vunpack.c.l.b16 %v105
  %v395 = vunpack.c.l.b16 %v106
  %v396 = vunpack.c.l.b16 %v107
  %v397 = vunpack.c.l.b16 %v108
  %v398 = vunpack.c.l.b16 %v109
  %v399 = vunpack.c.l.b16 %v110
  %v400 = vunpack.c.l.b16 %v111
  %v401 = vunpack.c.l.b16 %v112
  %v402 = vunpack.c.l.b16 %v113
  %v403 = vunpack.c.l.b16 %v114
  %v404 = vunpack.c.l.b16 %v115
  %v405 = vunpack.c.l.b16 %v116
  %v406 = vunpack.c.l.b16 %v117
  %v407 = vunpack.c.l.b16 %v118
  %v408 = vunpack.c.l.b16 %v119
  %v409 = vunpack.c.l.b16 %v120
  %v410 = vunpack.c.l.b16 %v121
  %v411 = vunpack.c.l.b16 %v122
  %v412 = vunpack.c.l.b16 %v123
  %v413 = vunpack.c.l.b16 %v124
  %v414 = vunpack.c.l.b16 %v125
  %v415 = vunpack.c.l.b16 %v126
  %v416 = vunpack.c.l.b16 %v127
  %v417 = vunpack.c.l.b16 %v128
  %v418 = vunpack.c.l.b16 %v129
  %v419 = vunpack.c.l.b16 %v130
  %v420 = vunpack.c.l.b16 %v131
  %v421 = vunpack.c.l.b16 %v132
  %v422 = vunpack.c.l.b16 %v133
  %v423 = vunpack.c.l.b16 %v134
  %v424 = vunpack.c.l.b16 %v135
  %v425 = vunpack.c.l.b16 %v136
  %v426 = vunpack.c.l.b16 %v137
  %v427 = vunpack.c.l.b16 %v138
  %v428 = vunpack.c.l.b16 %v139
  %v429 = vunpack.c.l.b16 %v140
  %v430 = vunpack.c.l.b16 %v141
  %v431 = vunpack.c.l.b16 %v142
  %v432 = vunpack.c.l.b16 %v143
  %v433 = vunpack.c.l.b16 %v144
  %v434 = vunpack.c.l.b16 %v145
  %v435 = vunpack.c.l.b16 %v146
  %v436 = vpack.c.b16 %v309, %v308
  %v437 = vpack.c.b16 %v311, %v310
  %v438 = vpack.c.b16 %v313, %v312
  %v439 = vpack.c.b16 %v315, %v314
  %v440 = vpack.c.b16 %v317, %v316
  %v441 = vpack.c.b16 %v319, %v318
  %v442 = vpack.c.b16 %v321, %v320
  %v443 = vpack.c.b16 %v323, %v322
  %v444 = vpack.c.b16 %v325, %v324
  %v445 = vpack.c.b16 %v327, %v326
  %v446 = vpack.c.b16 %v329, %v328
  %v447 = vpack.c.b16 %v331, %v330
  %v448 = vpack.c.b16 %v333, %v332
  %v449 = vpack.c.b16 %v335, %v334
  %v450 = vpack.c.b16 %v337, %v336
  %v451 = vpack.c.b16 %v339, %v338
  %v452 = vpack.c.b16 %v341, %v340
  %v453 = vpack.c.b16 %v343, %v342
  %v454 = vpack.c.b16 %v345, %v344
  %v455 = vpack.c.b16 %v347, %v346
  %v456 = vpack.c.b16 %v349, %v348
  %v457 = vpack.c.b16 %v351, %v350
  %v458 = vpack.c.b16 %v353, %v352
  %v459 = vpack.c.b16 %v355, %v354
  %v460 = vpack.c.b16 %v357, %v356
  %v461 = vpack.c.b16 %v359, %v358
  %v462 = vpack.c.b16 %v361, %v360
  %v463 = vpack.c.b16 %v363, %v362
  %v464 = vpack.c.b16 %v365, %v364
  %v465 = vpack.c.b16 %v367, %v366
  %v466 = vpack.c.b16 %v369, %v368
  %v467 = vpack.c.b16 %v371, %v370
  %v468 = vpack.c.b16 %v373, %v372
  %v469 = vpack.c.b16 %v375, %v374
  %v470 = vpack.c.b16 %v377, %v376
  %v471 = vpack.c.b16 %v379, %v378
  %v472 = vpack.c.b16 %v381, %v380
  %v473 = vpack.c.b16 %v383, %v382
  %v474 = vpack.c.b16 %v385, %v384
  %v475 = vpack.c.b16 %v387, %v386
  %v476 = vpack.c.b16 %v389, %v388
  %v477 = vpack.c.b16 %v391, %v390
  %v478 = vpack.c.b16 %v393, %v392
  %v479 = vpack.c.b16 %v395, %v394
  %v480 = vpack.c.b16 %v397, %v396
  %v481 = vpack.c.b16 %v399, %v398
  %v482 = vpack.c.b16 %v401, %v400
  %v483 = vpack.c.b16 %v403, %v402
  %v484 = vpack.c.b16 %v405, %v404
  %v485 = vpack.c.b16 %v407, %v406
  %v486 = vpack.c.b16 %v409, %v408
  %v487 = vpack.c.b16 %v411, %v410
  %v488 = vpack.c.b16 %v413, %v412
  %v489 = vpack.c.b16 %v415, %v414
  %v490 = vpack.c.b16 %v417, %v416
  %v491 = vpack.c.b16 %v419, %v418
  %v492 = vpack.c.b16 %v421, %v420
  %v493 = vpack.c.b16 %v423, %v422
  %v494 = vpack.c.b16 %v425, %v424
  %v495 = vpack.c.b16 %v427, %v426
  %v496 = vpack.c.b16 %v429, %v428
  %v497 = vpack.c.b16 %v431, %v430
  %v498 = vpack.c.b16 %v433, %v432
  %v499 = vpack.c.b16 %v435, %v434
  %564 = vmatprep.subr.bf16.mxu0 0
  %565 = vmatpush1.bf16.msra.mxu0 %v436
  %566 = vmatprep.subr.bf16.mxu0 0
  %567 = vmatpush1.bf16.msra.mxu0 %v437
  %568 = vmatprep.subr.bf16.mxu0 0
  %569 = vmatpush1.bf16.msra.mxu0 %v438
  %570 = vmatprep.subr.bf16.mxu0 0
  %571 = vmatpush1.bf16.msra.mxu0 %v439
  %572 = vmatprep.subr.bf16.mxu0 0
  %573 = vmatpush1.bf16.msra.mxu0 %v440
  %574 = vmatprep.subr.bf16.mxu0 0
  %575 = vmatpush1.bf16.msra.mxu0 %v441
  %576 = vmatprep.subr.bf16.mxu0 0
  %577 = vmatpush1.bf16.msra.mxu0 %v442
  %578 = vmatprep.subr.bf16.mxu0 0
  %579 = vmatpush1.bf16.msra.mxu0 %v443
  %580 = vmatprep.subr.bf16.mxu0 0
  %581 = vmatpush1.bf16.msra.mxu0 %v444
  %582 = vmatprep.subr.bf16.mxu0 0
  %583 = vmatpush1.bf16.msra.mxu0 %v445
  %584 = vmatprep.subr.bf16.mxu0 0
  %585 = vmatpush1.bf16.msra.mxu0 %v446
  %586 = vmatprep.subr.bf16.mxu0 0
  %587 = vmatpush1.bf16.msra.mxu0 %v447
  %588 = vmatprep.subr.bf16.mxu0 0
  %589 = vmatpush1.bf16.msra.mxu0 %v448
  %590 = vmatprep.subr.bf16.mxu0 0
  %591 = vmatpush1.bf16.msra.mxu0 %v449
  %592 = vmatprep.subr.bf16.mxu0 0
  %593 = vmatpush1.bf16.msra.mxu0 %v450
  %594 = vmatprep.subr.bf16.mxu0 0
  %595 = vmatpush1.bf16.msra.mxu0 %v451
  %596 = vmatprep.mubr.bf16.mxu0 %v165
  %597 = vmatmul.mubr.bf16.gmra.mrb[0].mxu0 %v164
  %v598 = vpop.f32.mrb[0].mxu0
  %v599 = vadd.f32 %v151, %v598
  %v600 = vpop.f32.mrb[0].mxu0
  %v601 = vpop.f32.mrb[0].mxu0
  %v602 = vpop.f32.mrb[0].mxu0
  %603 = vdwg.mxu0
  %604 = vmatprep.subr.bf16.mxu0 0
  %605 = vmatpush1.bf16.msra.mxu0 %v452
  %606 = vmatprep.subr.bf16.mxu0 0
  %607 = vmatpush1.bf16.msra.mxu0 %v453
  %608 = vmatprep.subr.bf16.mxu0 0
  %609 = vmatpush1.bf16.msra.mxu0 %v454
  %610 = vmatprep.subr.bf16.mxu0 0
  %611 = vmatpush1.bf16.msra.mxu0 %v455
  %612 = vmatprep.subr.bf16.mxu0 0
  %613 = vmatpush1.bf16.msra.mxu0 %v456
  %614 = vmatprep.subr.bf16.mxu0 0
  %615 = vmatpush1.bf16.msra.mxu0 %v457
  %616 = vmatprep.subr.bf16.mxu0 0
  %617 = vmatpush1.bf16.msra.mxu0 %v458
  %618 = vmatprep.subr.bf16.mxu0 0
  %619 = vmatpush1.bf16.msra.mxu0 %v459
  %620 = vmatprep.subr.bf16.mxu0 0
  %621 = vmatpush1.bf16.msra.mxu0 %v460
  %622 = vmatprep.subr.bf16.mxu0 0
  %623 = vmatpush1.bf16.msra.mxu0 %v461
  %624 = vmatprep.subr.bf16.mxu0 0
  %625 = vmatpush1.bf16.msra.mxu0 %v462
  %626 = vmatprep.subr.bf16.mxu0 0
  %627 = vmatpush1.bf16.msra.mxu0 %v463
  %628 = vmatprep.subr.bf16.mxu0 0
  %629 = vmatpush1.bf16.msra.mxu0 %v464
  %630 = vmatprep.subr.bf16.mxu0 0
  %631 = vmatpush1.bf16.msra.mxu0 %v465
  %632 = vmatprep.subr.bf16.mxu0 0
  %633 = vmatpush1.bf16.msra.mxu0 %v466
  %634 = vmatprep.subr.bf16.mxu0 0
  %635 = vmatpush1.bf16.msra.mxu0 %v467
  %636 = vmatprep.mubr.bf16.mxu0 %v167
  %637 = vmatmul.mubr.bf16.gmra.mrb[0].mxu0 %v166
  %v638 = vpop.f32.mrb[0].mxu0
  %v639 = vadd.f32 %v599, %v638
  %v640 = vpop.f32.mrb[0].mxu0
  %v641 = vpop.f32.mrb[0].mxu0
  %v642 = vpop.f32.mrb[0].mxu0
  %643 = vdwg.mxu0
  %644 = vmatprep.subr.bf16.mxu0 0
  %645 = vmatpush1.bf16.msra.mxu0 %v468
  %646 = vmatprep.subr.bf16.mxu0 0
  %647 = vmatpush1.bf16.msra.mxu0 %v469
  %648 = vmatprep.subr.bf16.mxu0 0
  %649 = vmatpush1.bf16.msra.mxu0 %v470
  %650 = vmatprep.subr.bf16.mxu0 0
  %651 = vmatpush1.bf16.msra.mxu0 %v471
  %652 = vmatprep.subr.bf16.mxu0 0
  %653 = vmatpush1.bf16.msra.mxu0 %v472
  %654 = vmatprep.subr.bf16.mxu0 0
  %655 = vmatpush1.bf16.msra.mxu0 %v473
  %656 = vmatprep.subr.bf16.mxu0 0
  %657 = vmatpush1.bf16.msra.mxu0 %v474
  %658 = vmatprep.subr.bf16.mxu0 0
  %659 = vmatpush1.bf16.msra.mxu0 %v475
  %660 = vmatprep.subr.bf16.mxu0 0
  %661 = vmatpush1.bf16.msra.mxu0 %v476
  %662 = vmatprep.subr.bf16.mxu0 0
  %663 = vmatpush1.bf16.msra.mxu0 %v477
  %664 = vmatprep.subr.bf16.mxu0 0
  %665 = vmatpush1.bf16.msra.mxu0 %v478
  %666 = vmatprep.subr.bf16.mxu0 0
  %667 = vmatpush1.bf16.msra.mxu0 %v479
  %668 = vmatprep.subr.bf16.mxu0 0
  %669 = vmatpush1.bf16.msra.mxu0 %v480
  %670 = vmatprep.subr.bf16.mxu0 0
  %671 = vmatpush1.bf16.msra.mxu0 %v481
  %672 = vmatprep.subr.bf16.mxu0 0
  %673 = vmatpush1.bf16.msra.mxu0 %v482
  %674 = vmatprep.subr.bf16.mxu0 0
  %675 = vmatpush1.bf16.msra.mxu0 %v483
  %676 = vmatprep.mubr.bf16.mxu0 %v169
  %677 = vmatmul.mubr.bf16.gmra.mrb[0].mxu0 %v168
  %v678 = vpop.f32.mrb[0].mxu0
  %v679 = vadd.f32 %v639, %v678
  %v680 = vpop.f32.mrb[0].mxu0
  %v681 = vpop.f32.mrb[0].mxu0
  %v682 = vpop.f32.mrb[0].mxu0
  %683 = vdwg.mxu0
  %684 = vmatprep.subr.bf16.mxu0 0
  %685 = vmatpush1.bf16.msra.mxu0 %v484
  %686 = vmatprep.subr.bf16.mxu0 0
  %687 = vmatpush1.bf16.msra.mxu0 %v485
  %688 = vmatprep.subr.bf16.mxu0 0
  %689 = vmatpush1.bf16.msra.mxu0 %v486
  %690 = vmatprep.subr.bf16.mxu0 0
  %691 = vmatpush1.bf16.msra.mxu0 %v487
  %692 = vmatprep.subr.bf16.mxu0 0
  %693 = vmatpush1.bf16.msra.mxu0 %v488
  %694 = vmatprep.subr.bf16.mxu0 0
  %695 = vmatpush1.bf16.msra.mxu0 %v489
  %696 = vmatprep.subr.bf16.mxu0 0
  %697 = vmatpush1.bf16.msra.mxu0 %v490
  %698 = vmatprep.subr.bf16.mxu0 0
  %699 = vmatpush1.bf16.msra.mxu0 %v491
  %700 = vmatprep.subr.bf16.mxu0 0
  %701 = vmatpush1.bf16.msra.mxu0 %v492
  %702 = vmatprep.subr.bf16.mxu0 0
  %703 = vmatpush1.bf16.msra.mxu0 %v493
  %704 = vmatprep.subr.bf16.mxu0 0
  %705 = vmatpush1.bf16.msra.mxu0 %v494
  %706 = vmatprep.subr.bf16.mxu0 0
  %707 = vmatpush1.bf16.msra.mxu0 %v495
  %708 = vmatprep.subr.bf16.mxu0 0
  %709 = vmatpush1.bf16.msra.mxu0 %v496
  %710 = vmatprep.subr.bf16.mxu0 0
  %711 = vmatpush1.bf16.msra.mxu0 %v497
  %712 = vmatprep.subr.bf16.mxu0 0
  %713 = vmatpush1.bf16.msra.mxu0 %v498
  %714 = vmatprep.subr.bf16.mxu0 0
  %715 = vmatpush1.bf16.msra.mxu0 %v499
  %716 = vmatprep.mubr.bf16.mxu0 %v171
  %717 = vmatmul.mubr.bf16.gmra.mrb[0].mxu0 %v170
  %v718 = vpop.f32.mrb[0].mxu0
  %v719 = vadd.f32 %v679, %v718
  %v720 = vpop.f32.mrb[0].mxu0
  %v721 = vpop.f32.mrb[0].mxu0
  %v722 = vpop.f32.mrb[0].mxu0
  %723 = vdwg.mxu0
  %724 = vst [vmem:[%s3] sm:$0xff] %v719
  // Predicated region
  $region14: #{discriminator_forward.9} parent=0 // pred_check
    _
  $region15: #{discriminator_forward.9} parent=0 // pred_check_branch
    %726 = sbr.rel (0) target = $region17
  $region16: #{discriminator_forward.9} parent=0 // pred_region
    _
  $region17: #{discriminator_forward.9} parent=0 // pred_fallthru
    _
  // Predicated region
  $region18: #{discriminator_forward.9} parent=0 // pred_check
    _
  $region19: #{discriminator_forward.9} parent=0 // pred_check_branch
    %728 = sbr.rel (0) target = $region21
  $region20: #{discriminator_forward.9} parent=0 // pred_region
    _
  $region21: #{discriminator_forward.9} parent=0 // pred_fallthru
    _

</llo_original>
